<compile_context>
chip_gen: v6e
topology: v6e:2x2x1
jax: 0.10.0
libtpu: 0.0.40
codegen_flags: <defaults>
</compile_context>

<pallas_src>
import functools
import math

import jax
import jax.numpy as jnp
from jax import lax
from jax.experimental import pallas as pl
from jax.experimental.pallas import tpu as pltpu

_LANE = 128


def _pad_to_lane(v):
    return ((v + _LANE - 1) // _LANE) * _LANE


def _vmem_limit_bytes(frac=0.75, fallback=48 * 1024 * 1024):
    """Generation-aware VMEM scoped limit (e.g. ~96 MiB on 128 MiB parts,
    ~48 MiB on v7x's 64 MiB parts)."""
    try:
        info = pltpu.get_tpu_info()
        cap = getattr(info, "vmem_capacity_bytes", None)
        if cap:
            return int(cap * frac)
    except Exception:
        pass
    return fallback


def _gelu_exact(x):
    # nn.GELU() default = exact (erf-based) GELU.
    return 0.5 * x * (1.0 + lax.erf(x / math.sqrt(2.0)))


def _groupnorm_gelu(y, gamma, beta, *, num_groups, c_real, eps):
    """Channels-last GroupNorm (== Permute->GroupNorm->Permute) + GELU on a
    resident (HW, C_pad) f32 slab.  Stats are masked to the real C channels so
    zero-padded lanes never pollute mean/var; padded lanes stay exactly 0."""
    hw, c_pad = y.shape
    cg = c_real // num_groups
    cnt = float(hw * cg)

    # Single-pass stats at full lane width: reduce over rows (HW) first.
    s1 = jnp.sum(y, axis=0, keepdims=True)        # (1, C_pad)
    s2 = jnp.sum(y * y, axis=0, keepdims=True)    # (1, C_pad)

    ch = lax.broadcasted_iota(jnp.int32, (1, c_pad), 1)
    mean_c = jnp.zeros((1, c_pad), jnp.float32)
    rstd_c = jnp.zeros((1, c_pad), jnp.float32)
    # Tiny static loop (G is small); only touches (1, C_pad) summary vectors.
    for g in range(num_groups):
        mask = (ch >= g * cg) & (ch < (g + 1) * cg)   # excludes padded lanes
        mg = jnp.sum(jnp.where(mask, s1, 0.0), keepdims=True) / cnt
        vg = jnp.sum(jnp.where(mask, s2, 0.0), keepdims=True) / cnt - mg * mg
        vg = jnp.maximum(vg, 0.0)   # guard against cancellation -> NaN rsqrt
        mean_c = jnp.where(mask, mg, mean_c)
        rstd_c = jnp.where(mask, lax.rsqrt(vg + eps), rstd_c)

    yn = (y - mean_c) * rstd_c
    return _gelu_exact(yn * gamma + beta)


# ----------------------- Fully fused FNN kernel (per batch) ------------------
def _fnn_fused_kernel(x_ref, *refs, steps, eps):
    o_ref = refs[-1]
    prm = refs[:-1]
    act = x_ref[...]                      # (HW, Cin_pad) bf16
    idx = 0
    for step in steps:
        kind = step["kind"]
        if kind in ("linear", "linear_gelu"):
            w = prm[idx][...]             # bf16 (K_pad, N_pad), resident
            b = prm[idx + 1][...]         # f32  (1, N_pad)
            idx += 2
            act = jnp.dot(act.astype(jnp.bfloat16), w,
                          preferred_element_type=jnp.float32) + b
            if kind == "linear_gelu":
                act = _gelu_exact(act)
        else:  # groupnorm_gelu
            gamma = prm[idx][...]
            beta = prm[idx + 1][...]
            idx += 2
            act = _groupnorm_gelu(act, gamma, beta,
                                  num_groups=step["num_groups"],
                                  c_real=step["c_real"], eps=eps)
    o_ref[...] = act.astype(o_ref.dtype)


def fnn_forward(x, layers, eps=1e-5):
    """Whole FNN forward as one pallas_call, grid over batch elements."""
    n, h, w_, cin = x.shape
    hw = h * w_
    cin_pad = _pad_to_lane(cin)

    # Channels-last rows; stream in bf16 (operands are bf16 on the MXU anyway).
    x2 = x.reshape(n, hw, cin).astype(jnp.bfloat16)
    if cin_pad != cin:
        x2 = jnp.pad(x2, ((0, 0), (0, 0), (0, cin_pad - cin)))

    # Build the static layer plan + lane-padded parameters.
    steps = []
    params = []
    cur_real, cur_pad = cin, cin_pad
    for layer in layers:
        if layer["kind"] == "linear":
            kin, kout = layer["w"].shape
            assert kin == cur_real
            kout_pad = _pad_to_lane(kout)
            w_p = jnp.zeros((cur_pad, kout_pad), jnp.bfloat16)
            w_p = w_p.at[:kin, :kout].set(layer["w"].astype(jnp.bfloat16))
            b_p = jnp.zeros((1, kout_pad), jnp.float32)
            b_p = b_p.at[0, :kout].set(layer["b"].astype(jnp.float32))
            params += [w_p, b_p]
            steps.append(dict(kind="linear_gelu" if layer["gelu"] else "linear"))
            cur_real, cur_pad = kout, kout_pad
        else:  # groupnorm_gelu
            assert cur_real % layer["num_groups"] == 0
            g_p = jnp.zeros((1, cur_pad), jnp.float32)
            g_p = g_p.at[0, :cur_real].set(layer["gamma"].astype(jnp.float32))
            bt_p = jnp.zeros((1, cur_pad), jnp.float32)
            bt_p = bt_p.at[0, :cur_real].set(layer["beta"].astype(jnp.float32))
            params += [g_p, bt_p]
            steps.append(dict(kind="groupnorm_gelu",
                              num_groups=layer["num_groups"], c_real=cur_real))
    cout, cout_pad = cur_real, cur_pad

    vmem_limit = _vmem_limit_bytes()
    # Rough per-batch VMEM budget: resident params + a few live f32 activation
    # slabs + double-buffered input/output blocks.
    param_bytes = sum(int(p.size) * p.dtype.itemsize for p in params)
    max_pad = max([cin_pad] + [int(p.shape[-1]) for p in params])
    est = (param_bytes
           + 4 * hw * max_pad * 4
           + 2 * hw * cin_pad * 2
           + 2 * hw * cout_pad * 4)
    assert est < vmem_limit, (
        "per-batch activation slab too large for VMEM; "
        "TODO(synk): tile over HW with a two-pass GroupNorm for very large H*W")

    in_specs = [pl.BlockSpec((None, hw, cin_pad), lambda i: (i, 0, 0))]
    # Weights/bias/gamma/beta: constant index_map -> resident across the grid.
    in_specs += [pl.BlockSpec(p.shape, lambda i: (0, 0)) for p in params]

    out = pl.pallas_call(
        functools.partial(_fnn_fused_kernel, steps=tuple(steps), eps=eps),
        out_shape=jax.ShapeDtypeStruct((n, hw, cout_pad), jnp.float32),
        grid=(n,),
        in_specs=in_specs,
        out_specs=pl.BlockSpec((None, hw, cout_pad), lambda i: (i, 0, 0)),
        compiler_params=pltpu.CompilerParams(
            dimension_semantics=("parallel",),
            vmem_limit_bytes=vmem_limit),
    )(x2, *params)

    # Drop padded lanes (exactly zero) and restore NHWC.
    return out[:, :, :cout].reshape(n, h, w_, cout)


# ---------------------- Parameter init / reference ---------------------------
def init_fnn_params(key, input_dim, hidden_dims, output_dim):
    """Mirrors FNN.__init__: Linear layers + GroupNorm every 5th hidden layer."""
    layers = []
    in_dim = input_dim
    count = 0
    for h_dim in hidden_dims:
        key, k1, k2 = jax.random.split(key, 3)
        bound = 1.0 / math.sqrt(in_dim)
        w = jax.random.uniform(k1, (in_dim, h_dim), jnp.float32, -bound, bound)
        b = jax.random.uniform(k2, (h_dim,), jnp.float32, -bound, bound)
        if count == 4:
            # Linear -> Premute(0,3,1,2) -> GroupNorm(2,h) -> Premute(0,2,3,1) -> GELU
            layers.append(dict(kind="linear", w=w, b=b, gelu=False))
            layers.append(dict(kind="groupnorm_gelu", num_groups=2,
                               gamma=jnp.ones((h_dim,), jnp.float32),
                               beta=jnp.zeros((h_dim,), jnp.float32)))
            count = 0
        else:
            layers.append(dict(kind="linear", w=w, b=b, gelu=True))
        in_dim = h_dim
        count += 1
    key, k1, k2 = jax.random.split(key, 3)
    bound = 1.0 / math.sqrt(in_dim)
    w = jax.random.uniform(k1, (in_dim, output_dim), jnp.float32, -bound, bound)
    b = jax.random.uniform(k2, (output_dim,), jnp.float32, -bound, bound)
    layers.append(dict(kind="linear", w=w, b=b, gelu=False))
    return layers


def fnn_reference(x, layers, mxu_dtype=jnp.float32):
    """Pure-JAX reference mirroring the PyTorch module semantics.
    mxu_dtype=bf16 replicates the kernel's bf16-operand / f32-accumulate dots."""
    n, h, w_, _ = x.shape
    act = x.astype(jnp.float32)
    for layer in layers:
        if layer["kind"] == "linear":
            act = jnp.dot(act.astype(mxu_dtype), layer["w"].astype(mxu_dtype),
                          preferred_element_type=jnp.float32) + layer["b"]
            if layer["gelu"]:
                act = jax.nn.gelu(act, approximate=False)
        else:
            g = layer["num_groups"]
            c = act.shape[-1]
            cg = c // g
            xg = act.reshape(n, h * w_, g, cg)
            mean = xg.mean(axis=(1, 3), keepdims=True)
            var = jnp.square(xg - mean).mean(axis=(1, 3), keepdims=True)
            xn = (xg - mean) / jnp.sqrt(var + 1e-5)
            y = xn.reshape(n, h, w_, c) * layer["gamma"] + layer["beta"]
            act = jax.nn.gelu(y, approximate=False)
    return act


if __name__ == "__main__":
    key = jax.random.PRNGKey(0)
    N, H, W, IN_DIM = 2, 4, 4, 8
    HIDDEN = [32, 32, 32, 32, 32, 32]   # 5th hidden layer triggers GroupNorm path
    OUT_DIM = 16

    kx, kp = jax.random.split(key)
    x = jax.random.normal(kx, (N, H, W, IN_DIM), jnp.float32)
    layers = init_fnn_params(kp, IN_DIM, HIDDEN, OUT_DIM)

    out = jax.block_until_ready(fnn_forward(x, layers))

    # Tight check vs a precision-matched (bf16-operand) reference ...
    ref_bf16 = fnn_reference(x, layers, jnp.bfloat16)
    # ... and a looser check vs the exact f32 PyTorch-equivalent semantics.
    ref_f32 = fnn_reference(x, layers, jnp.float32)

    assert out.shape == (N, H, W, OUT_DIM), out.shape
    assert bool(jnp.allclose(out, ref_bf16, rtol=5e-3, atol=5e-3)), \
        "Pallas vs precision-matched reference mismatch"
    assert bool(jnp.allclose(out, ref_f32, rtol=3e-2, atol=3e-2)), \
        "Pallas vs f32 reference mismatch"
    print("KERNEL_OK")
</pallas_src>

<mosaic_0001>
module attributes {stable_mosaic.version = 11 : i64} {
  func.func @_fnn_fused_kernel(%arg0: i32, %arg1: memref<1x16x128xbf16, #tpu.memory_space<vmem>>, %arg2: memref<128x128xbf16, #tpu.memory_space<vmem>>, %arg3: memref<1x128xf32, #tpu.memory_space<vmem>>, %arg4: memref<128x128xbf16, #tpu.memory_space<vmem>>, %arg5: memref<1x128xf32, #tpu.memory_space<vmem>>, %arg6: memref<128x128xbf16, #tpu.memory_space<vmem>>, %arg7: memref<1x128xf32, #tpu.memory_space<vmem>>, %arg8: memref<128x128xbf16, #tpu.memory_space<vmem>>, %arg9: memref<1x128xf32, #tpu.memory_space<vmem>>, %arg10: memref<128x128xbf16, #tpu.memory_space<vmem>>, %arg11: memref<1x128xf32, #tpu.memory_space<vmem>>, %arg12: memref<1x128xf32, #tpu.memory_space<vmem>>, %arg13: memref<1x128xf32, #tpu.memory_space<vmem>>, %arg14: memref<128x128xbf16, #tpu.memory_space<vmem>>, %arg15: memref<1x128xf32, #tpu.memory_space<vmem>>, %arg16: memref<128x128xbf16, #tpu.memory_space<vmem>>, %arg17: memref<1x128xf32, #tpu.memory_space<vmem>>, %arg18: memref<1x16x128xf32, #tpu.memory_space<vmem>>) attributes {dimension_semantics = [#tpu.dimension_semantics<parallel>], iteration_bounds = array<i64: 2>, scalar_prefetch = 0 : i64, scratch_operands = 0 : i64, tpu.core_type = #tpu.core_type<tc>, window_params = [{transform_indices = @transform_0, window_bounds = array<i64: 1, 16, 128>}, {pipeline_mode = #tpu.pipeline_mode<synchronous>, transform_indices = @transform_1, window_bounds = array<i64: 128, 128>}, {pipeline_mode = #tpu.pipeline_mode<synchronous>, transform_indices = @transform_2, window_bounds = array<i64: 1, 128>}, {pipeline_mode = #tpu.pipeline_mode<synchronous>, transform_indices = @transform_3, window_bounds = array<i64: 128, 128>}, {pipeline_mode = #tpu.pipeline_mode<synchronous>, transform_indices = @transform_4, window_bounds = array<i64: 1, 128>}, {pipeline_mode = #tpu.pipeline_mode<synchronous>, transform_indices = @transform_5, window_bounds = array<i64: 128, 128>}, {pipeline_mode = #tpu.pipeline_mode<synchronous>, transform_indices = @transform_6, window_bounds = array<i64: 1, 128>}, {pipeline_mode = #tpu.pipeline_mode<synchronous>, transform_indices = @transform_7, window_bounds = array<i64: 128, 128>}, {pipeline_mode = #tpu.pipeline_mode<synchronous>, transform_indices = @transform_8, window_bounds = array<i64: 1, 128>}, {pipeline_mode = #tpu.pipeline_mode<synchronous>, transform_indices = @transform_9, window_bounds = array<i64: 128, 128>}, {pipeline_mode = #tpu.pipeline_mode<synchronous>, transform_indices = @transform_10, window_bounds = array<i64: 1, 128>}, {pipeline_mode = #tpu.pipeline_mode<synchronous>, transform_indices = @transform_11, window_bounds = array<i64: 1, 128>}, {pipeline_mode = #tpu.pipeline_mode<synchronous>, transform_indices = @transform_12, window_bounds = array<i64: 1, 128>}, {pipeline_mode = #tpu.pipeline_mode<synchronous>, transform_indices = @transform_13, window_bounds = array<i64: 128, 128>}, {pipeline_mode = #tpu.pipeline_mode<synchronous>, transform_indices = @transform_14, window_bounds = array<i64: 1, 128>}, {pipeline_mode = #tpu.pipeline_mode<synchronous>, transform_indices = @transform_15, window_bounds = array<i64: 128, 128>}, {pipeline_mode = #tpu.pipeline_mode<synchronous>, transform_indices = @transform_16, window_bounds = array<i64: 1, 128>}, {transform_indices = @transform_17, window_bounds = array<i64: 1, 16, 128>}]} {
    %c0 = arith.constant 0 : index
    %c0_0 = arith.constant 0 : index
    %c0_1 = arith.constant 0 : index
    %0 = vector.load %arg1[%c0, %c0_0, %c0_1] : memref<1x16x128xbf16, #tpu.memory_space<vmem>>, vector<1x16x128xbf16>
    %1 = vector.shape_cast %0 : vector<1x16x128xbf16> to vector<16x128xbf16>
    %c0_2 = arith.constant 0 : index
    %c0_3 = arith.constant 0 : index
    %2 = vector.load %arg2[%c0_2, %c0_3] : memref<128x128xbf16, #tpu.memory_space<vmem>>, vector<128x128xbf16>
    %c0_4 = arith.constant 0 : index
    %c0_5 = arith.constant 0 : index
    %3 = vector.load %arg3[%c0_4, %c0_5] : memref<1x128xf32, #tpu.memory_space<vmem>>, vector<1x128xf32>
    %cst = arith.constant dense<0.000000e+00> : vector<16x128xf32>
    %4 = tpu.matmul %1, %2, %cst {dimension_numbers = #tpu.dot_dimension_numbers<[1], [0], [0], [1], [0, 0, 1, 1], [], []>} : vector<16x128xbf16>, vector<128x128xbf16>, vector<16x128xf32> -> vector<16x128xf32>
    %5 = vector.broadcast %3 : vector<1x128xf32> to vector<16x128xf32>
    %6 = arith.addf %4, %5 : vector<16x128xf32>
    %cst_6 = arith.constant 5.000000e-01 : f32
    %7 = vector.broadcast %cst_6 : f32 to vector<16x128xf32>
    %8 = arith.mulf %7, %6 : vector<16x128xf32>
    %cst_7 = arith.constant 1.41421354 : f32
    %9 = vector.broadcast %cst_7 : f32 to vector<16x128xf32>
    %10 = arith.divf %6, %9 : vector<16x128xf32>
    %11 = math.erf %10 : vector<16x128xf32>
    %cst_8 = arith.constant 1.000000e+00 : f32
    %12 = vector.broadcast %cst_8 : f32 to vector<16x128xf32>
    %13 = arith.addf %12, %11 : vector<16x128xf32>
    %14 = arith.mulf %8, %13 : vector<16x128xf32>
    %c0_9 = arith.constant 0 : index
    %c0_10 = arith.constant 0 : index
    %15 = vector.load %arg4[%c0_9, %c0_10] : memref<128x128xbf16, #tpu.memory_space<vmem>>, vector<128x128xbf16>
    %c0_11 = arith.constant 0 : index
    %c0_12 = arith.constant 0 : index
    %16 = vector.load %arg5[%c0_11, %c0_12] : memref<1x128xf32, #tpu.memory_space<vmem>>, vector<1x128xf32>
    %17 = arith.truncf %14 : vector<16x128xf32> to vector<16x128xbf16>
    %cst_13 = arith.constant dense<0.000000e+00> : vector<16x128xf32>
    %18 = tpu.matmul %17, %15, %cst_13 {dimension_numbers = #tpu.dot_dimension_numbers<[1], [0], [0], [1], [0, 0, 1, 1], [], []>} : vector<16x128xbf16>, vector<128x128xbf16>, vector<16x128xf32> -> vector<16x128xf32>
    %19 = vector.broadcast %16 : vector<1x128xf32> to vector<16x128xf32>
    %20 = arith.addf %18, %19 : vector<16x128xf32>
    %cst_14 = arith.constant 5.000000e-01 : f32
    %21 = vector.broadcast %cst_14 : f32 to vector<16x128xf32>
    %22 = arith.mulf %21, %20 : vector<16x128xf32>
    %cst_15 = arith.constant 1.41421354 : f32
    %23 = vector.broadcast %cst_15 : f32 to vector<16x128xf32>
    %24 = arith.divf %20, %23 : vector<16x128xf32>
    %25 = math.erf %24 : vector<16x128xf32>
    %cst_16 = arith.constant 1.000000e+00 : f32
    %26 = vector.broadcast %cst_16 : f32 to vector<16x128xf32>
    %27 = arith.addf %26, %25 : vector<16x128xf32>
    %28 = arith.mulf %22, %27 : vector<16x128xf32>
    %c0_17 = arith.constant 0 : index
    %c0_18 = arith.constant 0 : index
    %29 = vector.load %arg6[%c0_17, %c0_18] : memref<128x128xbf16, #tpu.memory_space<vmem>>, vector<128x128xbf16>
    %c0_19 = arith.constant 0 : index
    %c0_20 = arith.constant 0 : index
    %30 = vector.load %arg7[%c0_19, %c0_20] : memref<1x128xf32, #tpu.memory_space<vmem>>, vector<1x128xf32>
    %31 = arith.truncf %28 : vector<16x128xf32> to vector<16x128xbf16>
    %cst_21 = arith.constant dense<0.000000e+00> : vector<16x128xf32>
    %32 = tpu.matmul %31, %29, %cst_21 {dimension_numbers = #tpu.dot_dimension_numbers<[1], [0], [0], [1], [0, 0, 1, 1], [], []>} : vector<16x128xbf16>, vector<128x128xbf16>, vector<16x128xf32> -> vector<16x128xf32>
    %33 = vector.broadcast %30 : vector<1x128xf32> to vector<16x128xf32>
    %34 = arith.addf %32, %33 : vector<16x128xf32>
    %cst_22 = arith.constant 5.000000e-01 : f32
    %35 = vector.broadcast %cst_22 : f32 to vector<16x128xf32>
    %36 = arith.mulf %35, %34 : vector<16x128xf32>
    %cst_23 = arith.constant 1.41421354 : f32
    %37 = vector.broadcast %cst_23 : f32 to vector<16x128xf32>
    %38 = arith.divf %34, %37 : vector<16x128xf32>
    %39 = math.erf %38 : vector<16x128xf32>
    %cst_24 = arith.constant 1.000000e+00 : f32
    %40 = vector.broadcast %cst_24 : f32 to vector<16x128xf32>
    %41 = arith.addf %40, %39 : vector<16x128xf32>
    %42 = arith.mulf %36, %41 : vector<16x128xf32>
    %c0_25 = arith.constant 0 : index
    %c0_26 = arith.constant 0 : index
    %43 = vector.load %arg8[%c0_25, %c0_26] : memref<128x128xbf16, #tpu.memory_space<vmem>>, vector<128x128xbf16>
    %c0_27 = arith.constant 0 : index
    %c0_28 = arith.constant 0 : index
    %44 = vector.load %arg9[%c0_27, %c0_28] : memref<1x128xf32, #tpu.memory_space<vmem>>, vector<1x128xf32>
    %45 = arith.truncf %42 : vector<16x128xf32> to vector<16x128xbf16>
    %cst_29 = arith.constant dense<0.000000e+00> : vector<16x128xf32>
    %46 = tpu.matmul %45, %43, %cst_29 {dimension_numbers = #tpu.dot_dimension_numbers<[1], [0], [0], [1], [0, 0, 1, 1], [], []>} : vector<16x128xbf16>, vector<128x128xbf16>, vector<16x128xf32> -> vector<16x128xf32>
    %47 = vector.broadcast %44 : vector<1x128xf32> to vector<16x128xf32>
    %48 = arith.addf %46, %47 : vector<16x128xf32>
    %cst_30 = arith.constant 5.000000e-01 : f32
    %49 = vector.broadcast %cst_30 : f32 to vector<16x128xf32>
    %50 = arith.mulf %49, %48 : vector<16x128xf32>
    %cst_31 = arith.constant 1.41421354 : f32
    %51 = vector.broadcast %cst_31 : f32 to vector<16x128xf32>
    %52 = arith.divf %48, %51 : vector<16x128xf32>
    %53 = math.erf %52 : vector<16x128xf32>
    %cst_32 = arith.constant 1.000000e+00 : f32
    %54 = vector.broadcast %cst_32 : f32 to vector<16x128xf32>
    %55 = arith.addf %54, %53 : vector<16x128xf32>
    %56 = arith.mulf %50, %55 : vector<16x128xf32>
    %c0_33 = arith.constant 0 : index
    %c0_34 = arith.constant 0 : index
    %57 = vector.load %arg10[%c0_33, %c0_34] : memref<128x128xbf16, #tpu.memory_space<vmem>>, vector<128x128xbf16>
    %c0_35 = arith.constant 0 : index
    %c0_36 = arith.constant 0 : index
    %58 = vector.load %arg11[%c0_35, %c0_36] : memref<1x128xf32, #tpu.memory_space<vmem>>, vector<1x128xf32>
    %59 = arith.truncf %56 : vector<16x128xf32> to vector<16x128xbf16>
    %cst_37 = arith.constant dense<0.000000e+00> : vector<16x128xf32>
    %60 = tpu.matmul %59, %57, %cst_37 {dimension_numbers = #tpu.dot_dimension_numbers<[1], [0], [0], [1], [0, 0, 1, 1], [], []>} : vector<16x128xbf16>, vector<128x128xbf16>, vector<16x128xf32> -> vector<16x128xf32>
    %61 = vector.broadcast %58 : vector<1x128xf32> to vector<16x128xf32>
    %62 = arith.addf %60, %61 : vector<16x128xf32>
    %c0_38 = arith.constant 0 : index
    %c0_39 = arith.constant 0 : index
    %63 = vector.load %arg12[%c0_38, %c0_39] : memref<1x128xf32, #tpu.memory_space<vmem>>, vector<1x128xf32>
    %c0_40 = arith.constant 0 : index
    %c0_41 = arith.constant 0 : index
    %64 = vector.load %arg13[%c0_40, %c0_41] : memref<1x128xf32, #tpu.memory_space<vmem>>, vector<1x128xf32>
    %cst_42 = arith.constant dense<0.000000e+00> : vector<128xf32>
    %65 = vector.multi_reduction <add>, %62, %cst_42 [0] : vector<16x128xf32> to vector<128xf32>
    %66 = vector.shape_cast %65 : vector<128xf32> to vector<1x128xf32>
    %67 = arith.mulf %62, %62 : vector<16x128xf32>
    %cst_43 = arith.constant dense<0.000000e+00> : vector<128xf32>
    %68 = vector.multi_reduction <add>, %67, %cst_43 [0] : vector<16x128xf32> to vector<128xf32>
    %69 = vector.shape_cast %68 : vector<128xf32> to vector<1x128xf32>
    %70 = tpu.iota {dimensions = array<i32: 1>} : vector<1x128xi32>
    %cst_44 = arith.constant 0.000000e+00 : f32
    %71 = vector.broadcast %cst_44 : f32 to vector<1x128xf32>
    %cst_45 = arith.constant 0.000000e+00 : f32
    %72 = vector.broadcast %cst_45 : f32 to vector<1x128xf32>
    %c0_i32 = arith.constant 0 : i32
    %73 = vector.broadcast %c0_i32 : i32 to vector<1x128xi32>
    %74 = arith.cmpi sge, %70, %73 : vector<1x128xi32>
    %c16_i32 = arith.constant 16 : i32
    %75 = vector.broadcast %c16_i32 : i32 to vector<1x128xi32>
    %76 = arith.cmpi slt, %70, %75 : vector<1x128xi32>
    %77 = arith.andi %74, %76 : vector<1x128xi1>
    %cst_46 = arith.constant 0.000000e+00 : f32
    %78 = vector.broadcast %cst_46 : f32 to vector<1x128xf32>
    %79 = arith.select %77, %66, %78 : vector<1x128xi1>, vector<1x128xf32>
    %80 = vector.shape_cast %79 : vector<1x128xf32> to vector<1x1x128xf32>
    %cst_47 = arith.constant dense<0.000000e+00> : vector<1xf32>
    %81 = vector.multi_reduction <add>, %80, %cst_47 [1, 2] : vector<1x1x128xf32> to vector<1xf32>
    %82 = vector.shape_cast %81 : vector<1xf32> to vector<1x1x1xf32>
    %83 = vector.extract %82[0, 0, 0] : f32 from vector<1x1x1xf32>
    %84 = vector.broadcast %83 : f32 to vector<1x1xf32>
    %cst_48 = arith.constant 2.560000e+02 : f32
    %85 = vector.broadcast %cst_48 : f32 to vector<1x1xf32>
    %86 = arith.divf %84, %85 : vector<1x1xf32>
    %cst_49 = arith.constant 0.000000e+00 : f32
    %87 = vector.broadcast %cst_49 : f32 to vector<1x128xf32>
    %88 = arith.select %77, %69, %87 : vector<1x128xi1>, vector<1x128xf32>
    %89 = vector.shape_cast %88 : vector<1x128xf32> to vector<1x1x128xf32>
    %cst_50 = arith.constant dense<0.000000e+00> : vector<1xf32>
    %90 = vector.multi_reduction <add>, %89, %cst_50 [1, 2] : vector<1x1x128xf32> to vector<1xf32>
    %91 = vector.shape_cast %90 : vector<1xf32> to vector<1x1x1xf32>
    %92 = vector.extract %91[0, 0, 0] : f32 from vector<1x1x1xf32>
    %93 = vector.broadcast %92 : f32 to vector<1x1xf32>
    %cst_51 = arith.constant 2.560000e+02 : f32
    %94 = vector.broadcast %cst_51 : f32 to vector<1x1xf32>
    %95 = arith.divf %93, %94 : vector<1x1xf32>
    %96 = arith.mulf %86, %86 : vector<1x1xf32>
    %97 = arith.subf %95, %96 : vector<1x1xf32>
    %cst_52 = arith.constant 0.000000e+00 : f32
    %98 = vector.broadcast %cst_52 : f32 to vector<1x1xf32>
    %99 = arith.maximumf %97, %98 : vector<1x1xf32>
    %100 = vector.shape_cast %86 : vector<1x1xf32> to vector<1x1xf32>
    %101 = vector.broadcast %100 : vector<1x1xf32> to vector<1x128xf32>
    %102 = arith.select %77, %101, %71 : vector<1x128xi1>, vector<1x128xf32>
    %cst_53 = arith.constant 9.99999974E-6 : f32
    %103 = vector.broadcast %cst_53 : f32 to vector<1x1xf32>
    %104 = arith.addf %99, %103 : vector<1x1xf32>
    %105 = math.rsqrt %104 : vector<1x1xf32>
    %106 = vector.shape_cast %105 : vector<1x1xf32> to vector<1x1xf32>
    %107 = vector.broadcast %106 : vector<1x1xf32> to vector<1x128xf32>
    %108 = arith.select %77, %107, %72 : vector<1x128xi1>, vector<1x128xf32>
    %c16_i32_54 = arith.constant 16 : i32
    %109 = vector.broadcast %c16_i32_54 : i32 to vector<1x128xi32>
    %110 = arith.cmpi sge, %70, %109 : vector<1x128xi32>
    %c32_i32 = arith.constant 32 : i32
    %111 = vector.broadcast %c32_i32 : i32 to vector<1x128xi32>
    %112 = arith.cmpi slt, %70, %111 : vector<1x128xi32>
    %113 = arith.andi %110, %112 : vector<1x128xi1>
    %cst_55 = arith.constant 0.000000e+00 : f32
    %114 = vector.broadcast %cst_55 : f32 to vector<1x128xf32>
    %115 = arith.select %113, %66, %114 : vector<1x128xi1>, vector<1x128xf32>
    %116 = vector.shape_cast %115 : vector<1x128xf32> to vector<1x1x128xf32>
    %cst_56 = arith.constant dense<0.000000e+00> : vector<1xf32>
    %117 = vector.multi_reduction <add>, %116, %cst_56 [1, 2] : vector<1x1x128xf32> to vector<1xf32>
    %118 = vector.shape_cast %117 : vector<1xf32> to vector<1x1x1xf32>
    %119 = vector.extract %118[0, 0, 0] : f32 from vector<1x1x1xf32>
    %120 = vector.broadcast %119 : f32 to vector<1x1xf32>
    %cst_57 = arith.constant 2.560000e+02 : f32
    %121 = vector.broadcast %cst_57 : f32 to vector<1x1xf32>
    %122 = arith.divf %120, %121 : vector<1x1xf32>
    %cst_58 = arith.constant 0.000000e+00 : f32
    %123 = vector.broadcast %cst_58 : f32 to vector<1x128xf32>
    %124 = arith.select %113, %69, %123 : vector<1x128xi1>, vector<1x128xf32>
    %125 = vector.shape_cast %124 : vector<1x128xf32> to vector<1x1x128xf32>
    %cst_59 = arith.constant dense<0.000000e+00> : vector<1xf32>
    %126 = vector.multi_reduction <add>, %125, %cst_59 [1, 2] : vector<1x1x128xf32> to vector<1xf32>
    %127 = vector.shape_cast %126 : vector<1xf32> to vector<1x1x1xf32>
    %128 = vector.extract %127[0, 0, 0] : f32 from vector<1x1x1xf32>
    %129 = vector.broadcast %128 : f32 to vector<1x1xf32>
    %cst_60 = arith.constant 2.560000e+02 : f32
    %130 = vector.broadcast %cst_60 : f32 to vector<1x1xf32>
    %131 = arith.divf %129, %130 : vector<1x1xf32>
    %132 = arith.mulf %122, %122 : vector<1x1xf32>
    %133 = arith.subf %131, %132 : vector<1x1xf32>
    %cst_61 = arith.constant 0.000000e+00 : f32
    %134 = vector.broadcast %cst_61 : f32 to vector<1x1xf32>
    %135 = arith.maximumf %133, %134 : vector<1x1xf32>
    %136 = vector.shape_cast %122 : vector<1x1xf32> to vector<1x1xf32>
    %137 = vector.broadcast %136 : vector<1x1xf32> to vector<1x128xf32>
    %138 = arith.select %113, %137, %102 : vector<1x128xi1>, vector<1x128xf32>
    %cst_62 = arith.constant 9.99999974E-6 : f32
    %139 = vector.broadcast %cst_62 : f32 to vector<1x1xf32>
    %140 = arith.addf %135, %139 : vector<1x1xf32>
    %141 = math.rsqrt %140 : vector<1x1xf32>
    %142 = vector.shape_cast %141 : vector<1x1xf32> to vector<1x1xf32>
    %143 = vector.broadcast %142 : vector<1x1xf32> to vector<1x128xf32>
    %144 = arith.select %113, %143, %108 : vector<1x128xi1>, vector<1x128xf32>
    %145 = vector.broadcast %138 : vector<1x128xf32> to vector<16x128xf32>
    %146 = arith.subf %62, %145 : vector<16x128xf32>
    %147 = vector.broadcast %144 : vector<1x128xf32> to vector<16x128xf32>
    %148 = arith.mulf %146, %147 : vector<16x128xf32>
    %149 = vector.broadcast %63 : vector<1x128xf32> to vector<16x128xf32>
    %150 = arith.mulf %148, %149 : vector<16x128xf32>
    %151 = vector.broadcast %64 : vector<1x128xf32> to vector<16x128xf32>
    %152 = arith.addf %150, %151 : vector<16x128xf32>
    %cst_63 = arith.constant 5.000000e-01 : f32
    %153 = vector.broadcast %cst_63 : f32 to vector<16x128xf32>
    %154 = arith.mulf %153, %152 : vector<16x128xf32>
    %cst_64 = arith.constant 1.41421354 : f32
    %155 = vector.broadcast %cst_64 : f32 to vector<16x128xf32>
    %156 = arith.divf %152, %155 : vector<16x128xf32>
    %157 = math.erf %156 : vector<16x128xf32>
    %cst_65 = arith.constant 1.000000e+00 : f32
    %158 = vector.broadcast %cst_65 : f32 to vector<16x128xf32>
    %159 = arith.addf %158, %157 : vector<16x128xf32>
    %160 = arith.mulf %154, %159 : vector<16x128xf32>
    %c0_66 = arith.constant 0 : index
    %c0_67 = arith.constant 0 : index
    %161 = vector.load %arg14[%c0_66, %c0_67] : memref<128x128xbf16, #tpu.memory_space<vmem>>, vector<128x128xbf16>
    %c0_68 = arith.constant 0 : index
    %c0_69 = arith.constant 0 : index
    %162 = vector.load %arg15[%c0_68, %c0_69] : memref<1x128xf32, #tpu.memory_space<vmem>>, vector<1x128xf32>
    %163 = arith.truncf %160 : vector<16x128xf32> to vector<16x128xbf16>
    %cst_70 = arith.constant dense<0.000000e+00> : vector<16x128xf32>
    %164 = tpu.matmul %163, %161, %cst_70 {dimension_numbers = #tpu.dot_dimension_numbers<[1], [0], [0], [1], [0, 0, 1, 1], [], []>} : vector<16x128xbf16>, vector<128x128xbf16>, vector<16x128xf32> -> vector<16x128xf32>
    %165 = vector.broadcast %162 : vector<1x128xf32> to vector<16x128xf32>
    %166 = arith.addf %164, %165 : vector<16x128xf32>
    %cst_71 = arith.constant 5.000000e-01 : f32
    %167 = vector.broadcast %cst_71 : f32 to vector<16x128xf32>
    %168 = arith.mulf %167, %166 : vector<16x128xf32>
    %cst_72 = arith.constant 1.41421354 : f32
    %169 = vector.broadcast %cst_72 : f32 to vector<16x128xf32>
    %170 = arith.divf %166, %169 : vector<16x128xf32>
    %171 = math.erf %170 : vector<16x128xf32>
    %cst_73 = arith.constant 1.000000e+00 : f32
    %172 = vector.broadcast %cst_73 : f32 to vector<16x128xf32>
    %173 = arith.addf %172, %171 : vector<16x128xf32>
    %174 = arith.mulf %168, %173 : vector<16x128xf32>
    %c0_74 = arith.constant 0 : index
    %c0_75 = arith.constant 0 : index
    %175 = vector.load %arg16[%c0_74, %c0_75] : memref<128x128xbf16, #tpu.memory_space<vmem>>, vector<128x128xbf16>
    %c0_76 = arith.constant 0 : index
    %c0_77 = arith.constant 0 : index
    %176 = vector.load %arg17[%c0_76, %c0_77] : memref<1x128xf32, #tpu.memory_space<vmem>>, vector<1x128xf32>
    %177 = arith.truncf %174 : vector<16x128xf32> to vector<16x128xbf16>
    %cst_78 = arith.constant dense<0.000000e+00> : vector<16x128xf32>
    %178 = tpu.matmul %177, %175, %cst_78 {dimension_numbers = #tpu.dot_dimension_numbers<[1], [0], [0], [1], [0, 0, 1, 1], [], []>} : vector<16x128xbf16>, vector<128x128xbf16>, vector<16x128xf32> -> vector<16x128xf32>
    %179 = vector.broadcast %176 : vector<1x128xf32> to vector<16x128xf32>
    %180 = arith.addf %178, %179 : vector<16x128xf32>
    %c0_79 = arith.constant 0 : index
    %c0_80 = arith.constant 0 : index
    %c0_81 = arith.constant 0 : index
    %181 = vector.load %arg18[%c0_79, %c0_80, %c0_81] : memref<1x16x128xf32, #tpu.memory_space<vmem>>, vector<1x16x128xf32>
    %182 = vector.shape_cast %181 : vector<1x16x128xf32> to vector<16x128xf32>
    %183 = vector.shape_cast %180 : vector<16x128xf32> to vector<1x16x128xf32>
    tpu.vector_store %arg18[%c0_79, %c0_80, %c0_81], %183 {strides = array<i32>} : memref<1x16x128xf32, #tpu.memory_space<vmem>>, vector<1x16x128xf32>,
    return
  }
  func.func @transform_0(%arg0: i32) -> (i32, i32, i32) {
    %c0_i32 = arith.constant 0 : i32
    %c0_i32_0 = arith.constant 0 : i32
    %c0_i32_1 = arith.constant 0 : i32
    return %arg0, %c0_i32, %c0_i32_0 : i32, i32, i32
  }
  func.func @transform_1(%arg0: i32) -> (i32, i32) {
    %c0_i32 = arith.constant 0 : i32
    %c0_i32_0 = arith.constant 0 : i32
    %c0_i32_1 = arith.constant 0 : i32
    return %c0_i32, %c0_i32_0 : i32, i32
  }
  func.func @transform_2(%arg0: i32) -> (i32, i32) {
    %c0_i32 = arith.constant 0 : i32
    %c0_i32_0 = arith.constant 0 : i32
    %c0_i32_1 = arith.constant 0 : i32
    return %c0_i32, %c0_i32_0 : i32, i32
  }
  func.func @transform_3(%arg0: i32) -> (i32, i32) {
    %c0_i32 = arith.constant 0 : i32
    %c0_i32_0 = arith.constant 0 : i32
    %c0_i32_1 = arith.constant 0 : i32
    return %c0_i32, %c0_i32_0 : i32, i32
  }
  func.func @transform_4(%arg0: i32) -> (i32, i32) {
    %c0_i32 = arith.constant 0 : i32
    %c0_i32_0 = arith.constant 0 : i32
    %c0_i32_1 = arith.constant 0 : i32
    return %c0_i32, %c0_i32_0 : i32, i32
  }
  func.func @transform_5(%arg0: i32) -> (i32, i32) {
    %c0_i32 = arith.constant 0 : i32
    %c0_i32_0 = arith.constant 0 : i32
    %c0_i32_1 = arith.constant 0 : i32
    return %c0_i32, %c0_i32_0 : i32, i32
  }
  func.func @transform_6(%arg0: i32) -> (i32, i32) {
    %c0_i32 = arith.constant 0 : i32
    %c0_i32_0 = arith.constant 0 : i32
    %c0_i32_1 = arith.constant 0 : i32
    return %c0_i32, %c0_i32_0 : i32, i32
  }
  func.func @transform_7(%arg0: i32) -> (i32, i32) {
    %c0_i32 = arith.constant 0 : i32
    %c0_i32_0 = arith.constant 0 : i32
    %c0_i32_1 = arith.constant 0 : i32
    return %c0_i32, %c0_i32_0 : i32, i32
  }
  func.func @transform_8(%arg0: i32) -> (i32, i32) {
    %c0_i32 = arith.constant 0 : i32
    %c0_i32_0 = arith.constant 0 : i32
    %c0_i32_1 = arith.constant 0 : i32
    return %c0_i32, %c0_i32_0 : i32, i32
  }
  func.func @transform_9(%arg0: i32) -> (i32, i32) {
    %c0_i32 = arith.constant 0 : i32
    %c0_i32_0 = arith.constant 0 : i32
    %c0_i32_1 = arith.constant 0 : i32
    return %c0_i32, %c0_i32_0 : i32, i32
  }
  func.func @transform_10(%arg0: i32) -> (i32, i32) {
    %c0_i32 = arith.constant 0 : i32
    %c0_i32_0 = arith.constant 0 : i32
    %c0_i32_1 = arith.constant 0 : i32
    return %c0_i32, %c0_i32_0 : i32, i32
  }
  func.func @transform_11(%arg0: i32) -> (i32, i32) {
    %c0_i32 = arith.constant 0 : i32
    %c0_i32_0 = arith.constant 0 : i32
    %c0_i32_1 = arith.constant 0 : i32
    return %c0_i32, %c0_i32_0 : i32, i32
  }
  func.func @transform_12(%arg0: i32) -> (i32, i32) {
    %c0_i32 = arith.constant 0 : i32
    %c0_i32_0 = arith.constant 0 : i32
    %c0_i32_1 = arith.constant 0 : i32
    return %c0_i32, %c0_i32_0 : i32, i32
  }
  func.func @transform_13(%arg0: i32) -> (i32, i32) {
    %c0_i32 = arith.constant 0 : i32
    %c0_i32_0 = arith.constant 0 : i32
    %c0_i32_1 = arith.constant 0 : i32
    return %c0_i32, %c0_i32_0 : i32, i32
  }
  func.func @transform_14(%arg0: i32) -> (i32, i32) {
    %c0_i32 = arith.constant 0 : i32
    %c0_i32_0 = arith.constant 0 : i32
    %c0_i32_1 = arith.constant 0 : i32
    return %c0_i32, %c0_i32_0 : i32, i32
  }
  func.func @transform_15(%arg0: i32) -> (i32, i32) {
    %c0_i32 = arith.constant 0 : i32
    %c0_i32_0 = arith.constant 0 : i32
    %c0_i32_1 = arith.constant 0 : i32
    return %c0_i32, %c0_i32_0 : i32, i32
  }
  func.func @transform_16(%arg0: i32) -> (i32, i32) {
    %c0_i32 = arith.constant 0 : i32
    %c0_i32_0 = arith.constant 0 : i32
    %c0_i32_1 = arith.constant 0 : i32
    return %c0_i32, %c0_i32_0 : i32, i32
  }
  func.func @transform_17(%arg0: i32) -> (i32, i32, i32) {
    %c0_i32 = arith.constant 0 : i32
    %c0_i32_0 = arith.constant 0 : i32
    %c0_i32_1 = arith.constant 0 : i32
    return %arg0, %c0_i32, %c0_i32_0 : i32, i32, i32
  }
}

</mosaic_0001>

<llo_original>
// kernel: tpu_custom_call.1
$region0: #{tpu_custom_call.1}
  #allocation0 [shape = 'u32[]', space=smem, size = 0x4, offset = 0x4, fixed_abs, tag = 'smem constant byte address 0x4 - core index']
  #allocation1 [shape = 'u32[144,128]{1,0:T(1,128)}', space=vmem, size = 0x12000, scoped, tag = 'internal scratch']
  %s0 = inlined_call_operand.hbm [shape: bf16[2,16,128], index: 0, kind: input, shape index: {}]
  %s1 = inlined_call_operand.hbm [shape: bf16[128,128], index: 1, kind: input, shape index: {}]
  %s2 = inlined_call_operand.vmem [shape: f32[1,128], index: 2, kind: input, shape index: {}]
  %s3 = inlined_call_operand.hbm [shape: bf16[128,128], index: 3, kind: input, shape index: {}]
  %s4 = inlined_call_operand.vmem [shape: f32[1,128], index: 4, kind: input, shape index: {}]
  %s5 = inlined_call_operand.hbm [shape: bf16[128,128], index: 5, kind: input, shape index: {}]
  %s6 = inlined_call_operand.vmem [shape: f32[1,128], index: 6, kind: input, shape index: {}]
  %s7 = inlined_call_operand.hbm [shape: bf16[128,128], index: 7, kind: input, shape index: {}]
  %s8 = inlined_call_operand.vmem [shape: f32[1,128], index: 8, kind: input, shape index: {}]
  %s9 = inlined_call_operand.hbm [shape: bf16[128,128], index: 9, kind: input, shape index: {}]
  %s10 = inlined_call_operand.vmem [shape: f32[1,128], index: 10, kind: input, shape index: {}]
  %s11 = inlined_call_operand.vmem [shape: f32[1,128], index: 11, kind: input, shape index: {}]
  %s12 = inlined_call_operand.vmem [shape: f32[1,128], index: 12, kind: input, shape index: {}]
  %s13 = inlined_call_operand.hbm [shape: bf16[128,128], index: 13, kind: input, shape index: {}]
  %s14 = inlined_call_operand.vmem [shape: f32[1,128], index: 14, kind: input, shape index: {}]
  %s15 = inlined_call_operand.hbm [shape: bf16[128,128], index: 15, kind: input, shape index: {}]
  %s16 = inlined_call_operand.vmem [shape: f32[1,128], index: 16, kind: input, shape index: {}]
  %s17 = inlined_call_operand.hbm [shape: f32[2,16,128], index: 17, kind: output, shape index: {}]
  %s18 = sld [smem:[#allocation0]]
  $region133: #{tpu_custom_call.1} parent=0
    _
  %s20 = ssub.s32 1, %s18
  %s21 = scalar_select 0, %s20, %s18
  $region1: #{tpu_custom_call.1} parent=0
    #allocation2 [shape = 'u8[8192]{0}', space=vmem, size = 0x2000, scoped, tag = 'input window, operand 0']
    #allocation3 [shape = 's32[2]{0}', space=sflag, size = 0x8, scoped, tag = 'scoped memory for tpu_custom_call.1']
    #allocation4 [shape = 's32[2]{0}', space=sflag, size = 0x8, scoped, tag = 'scoped memory for tpu_custom_call.1']
    #allocation5 [shape = 'u8[32768]{0}', space=vmem, size = 0x8000, scoped, tag = 'input window, operand 1, single buffered']
    #allocation6 [shape = 's32[1]{0}', space=sflag, size = 0x4, scoped, tag = 'scoped memory for tpu_custom_call.1']
    #allocation7 [shape = 'u8[32768]{0}', space=vmem, size = 0x8000, scoped, tag = 'input window, operand 3, single buffered']
    #allocation8 [shape = 'u8[32768]{0}', space=vmem, size = 0x8000, scoped, tag = 'input window, operand 5, single buffered']
    #allocation9 [shape = 's32[1]{0}', space=sflag, size = 0x4, scoped, tag = 'scoped memory for tpu_custom_call.1']
    #allocation10 [shape = 'u8[32768]{0}', space=vmem, size = 0x8000, scoped, tag = 'input window, operand 7, single buffered']
    #allocation11 [shape = 'u8[32768]{0}', space=vmem, size = 0x8000, scoped, tag = 'input window, operand 9, single buffered']
    #allocation12 [shape = 's32[1]{0}', space=sflag, size = 0x4, scoped, tag = 'scoped memory for tpu_custom_call.1']
    #allocation13 [shape = 'u8[32768]{0}', space=vmem, size = 0x8000, scoped, tag = 'input window, operand 13, single buffered']
    #allocation14 [shape = 'u8[32768]{0}', space=vmem, size = 0x8000, scoped, tag = 'input window, operand 15, single buffered']
    #allocation15 [shape = 's32[1]{0}', space=sflag, size = 0x4, scoped, tag = 'scoped memory for tpu_custom_call.1']
    #allocation16 [shape = 'u8[16384]{0}', space=vmem, size = 0x4000, scoped, tag = 'output window, operand 0']
    %22 = vsyncpa [#allocation3], 0
    %s23 = scalar_lea.sflag [#allocation3], 1
    %24 = vsyncpa %s23, 0
    %25 = vsyncpa [#allocation6], 0
    %26 = vsyncpa [#allocation9], 0
    %27 = vsyncpa [#allocation12], 0
    %28 = vsyncpa [#allocation15], 0
    %29 = vsyncpa [#allocation4], 0
    %s30 = scalar_lea.sflag [#allocation4], 1
    %31 = vsyncpa %s30, 0
    loop: start=0, step=1, limit=4
    $region2: #{tpu_custom_call.1} parent=1 // loop_pre_header
      _
    $region3: #{tpu_custom_call.1} parent=1 // loop_header
      %s33 = sphi 0, %s37
      %p34 = scmp.ge.s32.totalorder %s33, 4
      %s43 = sphi 0, %s45
      %s46 = sphi 0, %s43
      %s47 = sphi 0, %s46
      %s63 = sphi 0, %s47
      %s67 = sphi 0, %s67
      %s69 = sphi 0, %s67
      %s70 = sphi 0, %s69
      %s84 = sphi 0, %s70
      %s88 = sphi 0, %s88
      %s90 = sphi 0, %s88
      %s91 = sphi 0, %s90
      %s105 = sphi 0, %s91
      %s109 = sphi 0, %s109
      %s111 = sphi 0, %s109
      %s112 = sphi 0, %s111
      %s126 = sphi 0, %s112
      %s130 = sphi 0, %s130
      %s132 = sphi 0, %s130
      %s133 = sphi 0, %s132
      %s147 = sphi 0, %s133
      %s151 = sphi 0, %s151
      %s153 = sphi 0, %s151
      %s154 = sphi 0, %s153
      %s168 = sphi 0, %s154
      %s172 = sphi 0, %s172
      %s174 = sphi 0, %s172
      %s175 = sphi 0, %s174
      %s189 = sphi 0, %s175
      %s193 = sphi 0, %s193
      %s195 = sphi 0, %s193
      %s196 = sphi 0, %s195
      %s210 = sphi 0, %s196
      %s214 = sphi 0, %s214
      %s216 = sphi 0, %s214
      %s217 = sphi 0, %s216
      %s231 = sphi 0, %s217
      %s235 = sphi 0, %s235
      %s237 = sphi 0, %s235
      %s238 = sphi 0, %s237
      %s252 = sphi 0, %s238
      %s256 = sphi 0, %s256
      %s258 = sphi 0, %s256
      %s259 = sphi 0, %s258
      %s273 = sphi 0, %s259
      %s277 = sphi 0, %s277
      %s279 = sphi 0, %s277
      %s280 = sphi 0, %s279
      %s294 = sphi 0, %s280
      %s298 = sphi 0, %s298
      %s300 = sphi 0, %s298
      %s301 = sphi 0, %s300
      %s315 = sphi 0, %s301
      %s319 = sphi 0, %s319
      %s321 = sphi 0, %s319
      %s322 = sphi 0, %s321
      %s336 = sphi 0, %s322
      %s340 = sphi 0, %s340
      %s342 = sphi 0, %s340
      %s343 = sphi 0, %s342
      %s357 = sphi 0, %s343
      %s361 = sphi 0, %s361
      %s363 = sphi 0, %s361
      %s364 = sphi 0, %s363
      %s378 = sphi 0, %s364
      %s382 = sphi 0, %s382
      %s384 = sphi 0, %s382
      %s385 = sphi 0, %s384
      %s399 = sphi 0, %s385
      %s405 = sphi 0, %s407
      %s408 = sphi 0, %s405
      %s409 = sphi 0, %s408
      %s425 = sphi 0, %s409
    $region4: #{tpu_custom_call.1} parent=1 // loop_header_branch
      %36 = sbr.rel (%p34) target = $region8
    $region5: #{tpu_custom_call.1} parent=1 // loop_body
      %s38 = ssub.s32 %s33, 1
      %s39 = ssub.s32 %s33, 2
      %s40 = sadd.s32 %s33, 1
      %s41 = ssub.s32 %s33, %s40
      %p42 = scmp.eq.s32.totalorder %s41, 0
      %s44 = sadd.s32 %s43, 1
      %s45 = scalar_select %p42, %s43, %s44
      %p48 = pneg %p42
      %p49 = scmp.eq.s32.totalorder %s33, 1
      %p50 = por %p48, %p49
      %p51 = scmp.ne.s32.totalorder %s43, %s46
      %p52 = scmp.eq.s32.totalorder %s33, 0
      %p53 = por %p51, %p52
      %p54 = scmp.ne.s32.totalorder %s43, %s46
      %p55 = scmp.eq.s32.totalorder %s38, 1
      %p56 = por %p54, %p55
      %p57 = scmp.ne.s32.totalorder %s46, %s47
      %p58 = scmp.eq.s32.totalorder %s38, 0
      %p59 = por %p57, %p58
      %p60 = scmp.ne.s32.totalorder %s46, %s47
      %p61 = scmp.eq.s32.totalorder %s39, 1
      %p62 = por %p60, %p61
      %p64 = scmp.ne.s32.totalorder %s47, %s63
      %p65 = scmp.eq.s32.totalorder %s39, 0
      %p66 = por %p64, %p65
      %s68 = sadd.s32 %s67, 1
      %p71 = scmp.eq.s32.totalorder %s33, 1
      %p72 = scmp.ne.s32.totalorder %s67, %s69
      %p73 = scmp.eq.s32.totalorder %s33, 0
      %p74 = por %p72, %p73
      %p75 = scmp.ne.s32.totalorder %s67, %s69
      %p76 = scmp.eq.s32.totalorder %s38, 1
      %p77 = por %p75, %p76
      %p78 = scmp.ne.s32.totalorder %s69, %s70
      %p79 = scmp.eq.s32.totalorder %s38, 0
      %p80 = por %p78, %p79
      %p81 = scmp.ne.s32.totalorder %s69, %s70
      %p82 = scmp.eq.s32.totalorder %s39, 1
      %p83 = por %p81, %p82
      %p85 = scmp.ne.s32.totalorder %s70, %s84
      %p86 = scmp.eq.s32.totalorder %s39, 0
      %p87 = por %p85, %p86
      %s89 = sadd.s32 %s88, 1
      %p92 = scmp.eq.s32.totalorder %s33, 1
      %p93 = scmp.ne.s32.totalorder %s88, %s90
      %p94 = scmp.eq.s32.totalorder %s33, 0
      %p95 = por %p93, %p94
      %p96 = scmp.ne.s32.totalorder %s88, %s90
      %p97 = scmp.eq.s32.totalorder %s38, 1
      %p98 = por %p96, %p97
      %p99 = scmp.ne.s32.totalorder %s90, %s91
      %p100 = scmp.eq.s32.totalorder %s38, 0
      %p101 = por %p99, %p100
      %p102 = scmp.ne.s32.totalorder %s90, %s91
      %p103 = scmp.eq.s32.totalorder %s39, 1
      %p104 = por %p102, %p103
      %p106 = scmp.ne.s32.totalorder %s91, %s105
      %p107 = scmp.eq.s32.totalorder %s39, 0
      %p108 = por %p106, %p107
      %s110 = sadd.s32 %s109, 1
      %p113 = scmp.eq.s32.totalorder %s33, 1
      %p114 = scmp.ne.s32.totalorder %s109, %s111
      %p115 = scmp.eq.s32.totalorder %s33, 0
      %p116 = por %p114, %p115
      %p117 = scmp.ne.s32.totalorder %s109, %s111
      %p118 = scmp.eq.s32.totalorder %s38, 1
      %p119 = por %p117, %p118
      %p120 = scmp.ne.s32.totalorder %s111, %s112
      %p121 = scmp.eq.s32.totalorder %s38, 0
      %p122 = por %p120, %p121
      %p123 = scmp.ne.s32.totalorder %s111, %s112
      %p124 = scmp.eq.s32.totalorder %s39, 1
      %p125 = por %p123, %p124
      %p127 = scmp.ne.s32.totalorder %s112, %s126
      %p128 = scmp.eq.s32.totalorder %s39, 0
      %p129 = por %p127, %p128
      %s131 = sadd.s32 %s130, 1
      %p134 = scmp.eq.s32.totalorder %s33, 1
      %p135 = scmp.ne.s32.totalorder %s130, %s132
      %p136 = scmp.eq.s32.totalorder %s33, 0
      %p137 = por %p135, %p136
      %p138 = scmp.ne.s32.totalorder %s130, %s132
      %p139 = scmp.eq.s32.totalorder %s38, 1
      %p140 = por %p138, %p139
      %p141 = scmp.ne.s32.totalorder %s132, %s133
      %p142 = scmp.eq.s32.totalorder %s38, 0
      %p143 = por %p141, %p142
      %p144 = scmp.ne.s32.totalorder %s132, %s133
      %p145 = scmp.eq.s32.totalorder %s39, 1
      %p146 = por %p144, %p145
      %p148 = scmp.ne.s32.totalorder %s133, %s147
      %p149 = scmp.eq.s32.totalorder %s39, 0
      %p150 = por %p148, %p149
      %s152 = sadd.s32 %s151, 1
      %p155 = scmp.eq.s32.totalorder %s33, 1
      %p156 = scmp.ne.s32.totalorder %s151, %s153
      %p157 = scmp.eq.s32.totalorder %s33, 0
      %p158 = por %p156, %p157
      %p159 = scmp.ne.s32.totalorder %s151, %s153
      %p160 = scmp.eq.s32.totalorder %s38, 1
      %p161 = por %p159, %p160
      %p162 = scmp.ne.s32.totalorder %s153, %s154
      %p163 = scmp.eq.s32.totalorder %s38, 0
      %p164 = por %p162, %p163
      %p165 = scmp.ne.s32.totalorder %s153, %s154
      %p166 = scmp.eq.s32.totalorder %s39, 1
      %p167 = por %p165, %p166
      %p169 = scmp.ne.s32.totalorder %s154, %s168
      %p170 = scmp.eq.s32.totalorder %s39, 0
      %p171 = por %p169, %p170
      %s173 = sadd.s32 %s172, 1
      %p176 = scmp.eq.s32.totalorder %s33, 1
      %p177 = scmp.ne.s32.totalorder %s172, %s174
      %p178 = scmp.eq.s32.totalorder %s33, 0
      %p179 = por %p177, %p178
      %p180 = scmp.ne.s32.totalorder %s172, %s174
      %p181 = scmp.eq.s32.totalorder %s38, 1
      %p182 = por %p180, %p181
      %p183 = scmp.ne.s32.totalorder %s174, %s175
      %p184 = scmp.eq.s32.totalorder %s38, 0
      %p185 = por %p183, %p184
      %p186 = scmp.ne.s32.totalorder %s174, %s175
      %p187 = scmp.eq.s32.totalorder %s39, 1
      %p188 = por %p186, %p187
      %p190 = scmp.ne.s32.totalorder %s175, %s189
      %p191 = scmp.eq.s32.totalorder %s39, 0
      %p192 = por %p190, %p191
      %s194 = sadd.s32 %s193, 1
      %p197 = scmp.eq.s32.totalorder %s33, 1
      %p198 = scmp.ne.s32.totalorder %s193, %s195
      %p199 = scmp.eq.s32.totalorder %s33, 0
      %p200 = por %p198, %p199
      %p201 = scmp.ne.s32.totalorder %s193, %s195
      %p202 = scmp.eq.s32.totalorder %s38, 1
      %p203 = por %p201, %p202
      %p204 = scmp.ne.s32.totalorder %s195, %s196
      %p205 = scmp.eq.s32.totalorder %s38, 0
      %p206 = por %p204, %p205
      %p207 = scmp.ne.s32.totalorder %s195, %s196
      %p208 = scmp.eq.s32.totalorder %s39, 1
      %p209 = por %p207, %p208
      %p211 = scmp.ne.s32.totalorder %s196, %s210
      %p212 = scmp.eq.s32.totalorder %s39, 0
      %p213 = por %p211, %p212
      %s215 = sadd.s32 %s214, 1
      %p218 = scmp.eq.s32.totalorder %s33, 1
      %p219 = scmp.ne.s32.totalorder %s214, %s216
      %p220 = scmp.eq.s32.totalorder %s33, 0
      %p221 = por %p219, %p220
      %p222 = scmp.ne.s32.totalorder %s214, %s216
      %p223 = scmp.eq.s32.totalorder %s38, 1
      %p224 = por %p222, %p223
      %p225 = scmp.ne.s32.totalorder %s216, %s217
      %p226 = scmp.eq.s32.totalorder %s38, 0
      %p227 = por %p225, %p226
      %p228 = scmp.ne.s32.totalorder %s216, %s217
      %p229 = scmp.eq.s32.totalorder %s39, 1
      %p230 = por %p228, %p229
      %p232 = scmp.ne.s32.totalorder %s217, %s231
      %p233 = scmp.eq.s32.totalorder %s39, 0
      %p234 = por %p232, %p233
      %s236 = sadd.s32 %s235, 1
      %p239 = scmp.eq.s32.totalorder %s33, 1
      %p240 = scmp.ne.s32.totalorder %s235, %s237
      %p241 = scmp.eq.s32.totalorder %s33, 0
      %p242 = por %p240, %p241
      %p243 = scmp.ne.s32.totalorder %s235, %s237
      %p244 = scmp.eq.s32.totalorder %s38, 1
      %p245 = por %p243, %p244
      %p246 = scmp.ne.s32.totalorder %s237, %s238
      %p247 = scmp.eq.s32.totalorder %s38, 0
      %p248 = por %p246, %p247
      %p249 = scmp.ne.s32.totalorder %s237, %s238
      %p250 = scmp.eq.s32.totalorder %s39, 1
      %p251 = por %p249, %p250
      %p253 = scmp.ne.s32.totalorder %s238, %s252
      %p254 = scmp.eq.s32.totalorder %s39, 0
      %p255 = por %p253, %p254
      %s257 = sadd.s32 %s256, 1
      %p260 = scmp.eq.s32.totalorder %s33, 1
      %p261 = scmp.ne.s32.totalorder %s256, %s258
      %p262 = scmp.eq.s32.totalorder %s33, 0
      %p263 = por %p261, %p262
      %p264 = scmp.ne.s32.totalorder %s256, %s258
      %p265 = scmp.eq.s32.totalorder %s38, 1
      %p266 = por %p264, %p265
      %p267 = scmp.ne.s32.totalorder %s258, %s259
      %p268 = scmp.eq.s32.totalorder %s38, 0
      %p269 = por %p267, %p268
      %p270 = scmp.ne.s32.totalorder %s258, %s259
      %p271 = scmp.eq.s32.totalorder %s39, 1
      %p272 = por %p270, %p271
      %p274 = scmp.ne.s32.totalorder %s259, %s273
      %p275 = scmp.eq.s32.totalorder %s39, 0
      %p276 = por %p274, %p275
      %s278 = sadd.s32 %s277, 1
      %p281 = scmp.eq.s32.totalorder %s33, 1
      %p282 = scmp.ne.s32.totalorder %s277, %s279
      %p283 = scmp.eq.s32.totalorder %s33, 0
      %p284 = por %p282, %p283
      %p285 = scmp.ne.s32.totalorder %s277, %s279
      %p286 = scmp.eq.s32.totalorder %s38, 1
      %p287 = por %p285, %p286
      %p288 = scmp.ne.s32.totalorder %s279, %s280
      %p289 = scmp.eq.s32.totalorder %s38, 0
      %p290 = por %p288, %p289
      %p291 = scmp.ne.s32.totalorder %s279, %s280
      %p292 = scmp.eq.s32.totalorder %s39, 1
      %p293 = por %p291, %p292
      %p295 = scmp.ne.s32.totalorder %s280, %s294
      %p296 = scmp.eq.s32.totalorder %s39, 0
      %p297 = por %p295, %p296
      %s299 = sadd.s32 %s298, 1
      %p302 = scmp.eq.s32.totalorder %s33, 1
      %p303 = scmp.ne.s32.totalorder %s298, %s300
      %p304 = scmp.eq.s32.totalorder %s33, 0
      %p305 = por %p303, %p304
      %p306 = scmp.ne.s32.totalorder %s298, %s300
      %p307 = scmp.eq.s32.totalorder %s38, 1
      %p308 = por %p306, %p307
      %p309 = scmp.ne.s32.totalorder %s300, %s301
      %p310 = scmp.eq.s32.totalorder %s38, 0
      %p311 = por %p309, %p310
      %p312 = scmp.ne.s32.totalorder %s300, %s301
      %p313 = scmp.eq.s32.totalorder %s39, 1
      %p314 = por %p312, %p313
      %p316 = scmp.ne.s32.totalorder %s301, %s315
      %p317 = scmp.eq.s32.totalorder %s39, 0
      %p318 = por %p316, %p317
      %s320 = sadd.s32 %s319, 1
      %p323 = scmp.eq.s32.totalorder %s33, 1
      %p324 = scmp.ne.s32.totalorder %s319, %s321
      %p325 = scmp.eq.s32.totalorder %s33, 0
      %p326 = por %p324, %p325
      %p327 = scmp.ne.s32.totalorder %s319, %s321
      %p328 = scmp.eq.s32.totalorder %s38, 1
      %p329 = por %p327, %p328
      %p330 = scmp.ne.s32.totalorder %s321, %s322
      %p331 = scmp.eq.s32.totalorder %s38, 0
      %p332 = por %p330, %p331
      %p333 = scmp.ne.s32.totalorder %s321, %s322
      %p334 = scmp.eq.s32.totalorder %s39, 1
      %p335 = por %p333, %p334
      %p337 = scmp.ne.s32.totalorder %s322, %s336
      %p338 = scmp.eq.s32.totalorder %s39, 0
      %p339 = por %p337, %p338
      %s341 = sadd.s32 %s340, 1
      %p344 = scmp.eq.s32.totalorder %s33, 1
      %p345 = scmp.ne.s32.totalorder %s340, %s342
      %p346 = scmp.eq.s32.totalorder %s33, 0
      %p347 = por %p345, %p346
      %p348 = scmp.ne.s32.totalorder %s340, %s342
      %p349 = scmp.eq.s32.totalorder %s38, 1
      %p350 = por %p348, %p349
      %p351 = scmp.ne.s32.totalorder %s342, %s343
      %p352 = scmp.eq.s32.totalorder %s38, 0
      %p353 = por %p351, %p352
      %p354 = scmp.ne.s32.totalorder %s342, %s343
      %p355 = scmp.eq.s32.totalorder %s39, 1
      %p356 = por %p354, %p355
      %p358 = scmp.ne.s32.totalorder %s343, %s357
      %p359 = scmp.eq.s32.totalorder %s39, 0
      %p360 = por %p358, %p359
      %s362 = sadd.s32 %s361, 1
      %p365 = scmp.eq.s32.totalorder %s33, 1
      %p366 = scmp.ne.s32.totalorder %s361, %s363
      %p367 = scmp.eq.s32.totalorder %s33, 0
      %p368 = por %p366, %p367
      %p369 = scmp.ne.s32.totalorder %s361, %s363
      %p370 = scmp.eq.s32.totalorder %s38, 1
      %p371 = por %p369, %p370
      %p372 = scmp.ne.s32.totalorder %s363, %s364
      %p373 = scmp.eq.s32.totalorder %s38, 0
      %p374 = por %p372, %p373
      %p375 = scmp.ne.s32.totalorder %s363, %s364
      %p376 = scmp.eq.s32.totalorder %s39, 1
      %p377 = por %p375, %p376
      %p379 = scmp.ne.s32.totalorder %s364, %s378
      %p380 = scmp.eq.s32.totalorder %s39, 0
      %p381 = por %p379, %p380
      %s383 = sadd.s32 %s382, 1
      %p386 = scmp.eq.s32.totalorder %s33, 1
      %p387 = scmp.ne.s32.totalorder %s382, %s384
      %p388 = scmp.eq.s32.totalorder %s33, 0
      %p389 = por %p387, %p388
      %p390 = scmp.ne.s32.totalorder %s382, %s384
      %p391 = scmp.eq.s32.totalorder %s38, 1
      %p392 = por %p390, %p391
      %p393 = scmp.ne.s32.totalorder %s384, %s385
      %p394 = scmp.eq.s32.totalorder %s38, 0
      %p395 = por %p393, %p394
      %p396 = scmp.ne.s32.totalorder %s384, %s385
      %p397 = scmp.eq.s32.totalorder %s39, 1
      %p398 = por %p396, %p397
      %p400 = scmp.ne.s32.totalorder %s385, %s399
      %p401 = scmp.eq.s32.totalorder %s39, 0
      %p402 = por %p400, %p401
      %s403 = ssub.s32 %s33, %s40
      %p404 = scmp.eq.s32.totalorder %s403, 0
      %s406 = sadd.s32 %s405, 1
      %s407 = scalar_select %p404, %s405, %s406
      %p410 = pneg %p404
      %p411 = scmp.eq.s32.totalorder %s33, 1
      %p412 = por %p410, %p411
      %p413 = scmp.ne.s32.totalorder %s405, %s408
      %p414 = scmp.eq.s32.totalorder %s33, 0
      %p415 = por %p413, %p414
      %p416 = scmp.ne.s32.totalorder %s405, %s408
      %p417 = scmp.eq.s32.totalorder %s38, 1
      %p418 = por %p416, %p417
      %p419 = scmp.ne.s32.totalorder %s408, %s409
      %p420 = scmp.eq.s32.totalorder %s38, 0
      %p421 = por %p419, %p420
      %p422 = scmp.ne.s32.totalorder %s408, %s409
      %p423 = scmp.eq.s32.totalorder %s39, 1
      %p424 = por %p422, %p423
      %p426 = scmp.ne.s32.totalorder %s409, %s425
      %p427 = scmp.eq.s32.totalorder %s39, 0
      %p428 = por %p426, %p427
      %p429 = scmp.le.s32.totalorder 1, %s33
      %p430 = scmp.lt.s32.totalorder %s33, 3
      %p431 = pnand %p429, %p430
      %p432 = pneg %p431
      // Predicated region
      $region9: #{tpu_custom_call.1} parent=5 // pred_check
        _
      $region10: #{tpu_custom_call.1} parent=5 // pred_check_branch
        %434 = sbr.rel (%p431) target = $region12
      $region11: #{tpu_custom_call.1} parent=5 // pred_region
        %s435 = ssub.s32 %s33, 1
        // Predicated region
        $region13: #{tpu_custom_call.1} parent=11 // pred_check
          %p436 = pneg %p80
        $region14: #{tpu_custom_call.1} parent=11 // pred_check_branch
          %438 = sbr.rel (%p436) target = $region16
        $region15: #{tpu_custom_call.1} parent=11 // pred_region
          %s440 = ssub.s32 1024, 1024
          %441 = vsyncadd [#allocation6], %s440
          %s442 = sshll.u32 [#allocation5], 4
          %s443 = int_to_ptr.vmem [resolvable:$true] %s442
          %448 = dma.hbm_to_vmem [thread:$0]  %s1, 1024, %s443, [#allocation6], 64, 64, 4
        $region16: #{tpu_custom_call.1} parent=11 // pred_fallthru
          _
        // Predicated region
        $region17: #{tpu_custom_call.1} parent=11 // pred_check
          %p449 = pneg %p101
        $region18: #{tpu_custom_call.1} parent=11 // pred_check_branch
          %451 = sbr.rel (%p449) target = $region20
        $region19: #{tpu_custom_call.1} parent=11 // pred_region
          _
        $region20: #{tpu_custom_call.1} parent=11 // pred_fallthru
          _
        // Predicated region
        $region21: #{tpu_custom_call.1} parent=11 // pred_check
          %p452 = pneg %p122
        $region22: #{tpu_custom_call.1} parent=11 // pred_check_branch
          %454 = sbr.rel (%p452) target = $region24
        $region23: #{tpu_custom_call.1} parent=11 // pred_region
          %s456 = ssub.s32 1024, 1024
          %457 = vsyncadd [#allocation6], %s456
          %s458 = sshll.u32 [#allocation7], 4
          %s459 = int_to_ptr.vmem [resolvable:$true] %s458
          %464 = dma.hbm_to_vmem [thread:$0]  %s3, 1024, %s459, [#allocation6], 64, 64, 4
        $region24: #{tpu_custom_call.1} parent=11 // pred_fallthru
          _
        // Predicated region
        $region25: #{tpu_custom_call.1} parent=11 // pred_check
          %p465 = pneg %p143
        $region26: #{tpu_custom_call.1} parent=11 // pred_check_branch
          %467 = sbr.rel (%p465) target = $region28
        $region27: #{tpu_custom_call.1} parent=11 // pred_region
          _
        $region28: #{tpu_custom_call.1} parent=11 // pred_fallthru
          _
        // Predicated region
        $region29: #{tpu_custom_call.1} parent=11 // pred_check
          %p468 = pneg %p164
        $region30: #{tpu_custom_call.1} parent=11 // pred_check_branch
          %470 = sbr.rel (%p468) target = $region32
        $region31: #{tpu_custom_call.1} parent=11 // pred_region
          %s472 = ssub.s32 1024, 1024
          %473 = vsyncadd [#allocation9], %s472
          %s474 = sshll.u32 [#allocation8], 4
          %s475 = int_to_ptr.vmem [resolvable:$true] %s474
          %480 = dma.hbm_to_vmem [thread:$0]  %s5, 1024, %s475, [#allocation9], 64, 64, 4
        $region32: #{tpu_custom_call.1} parent=11 // pred_fallthru
          _
        // Predicated region
        $region33: #{tpu_custom_call.1} parent=11 // pred_check
          %p481 = pneg %p185
        $region34: #{tpu_custom_call.1} parent=11 // pred_check_branch
          %483 = sbr.rel (%p481) target = $region36
        $region35: #{tpu_custom_call.1} parent=11 // pred_region
          _
        $region36: #{tpu_custom_call.1} parent=11 // pred_fallthru
          _
        // Predicated region
        $region37: #{tpu_custom_call.1} parent=11 // pred_check
          %p484 = pneg %p206
        $region38: #{tpu_custom_call.1} parent=11 // pred_check_branch
          %486 = sbr.rel (%p484) target = $region40
        $region39: #{tpu_custom_call.1} parent=11 // pred_region
          %s488 = ssub.s32 1024, 1024
          %489 = vsyncadd [#allocation9], %s488
          %s490 = sshll.u32 [#allocation10], 4
          %s491 = int_to_ptr.vmem [resolvable:$true] %s490
          %496 = dma.hbm_to_vmem [thread:$0]  %s7, 1024, %s491, [#allocation9], 64, 64, 4
        $region40: #{tpu_custom_call.1} parent=11 // pred_fallthru
          _
        // Predicated region
        $region41: #{tpu_custom_call.1} parent=11 // pred_check
          %p497 = pneg %p227
        $region42: #{tpu_custom_call.1} parent=11 // pred_check_branch
          %499 = sbr.rel (%p497) target = $region44
        $region43: #{tpu_custom_call.1} parent=11 // pred_region
          _
        $region44: #{tpu_custom_call.1} parent=11 // pred_fallthru
          _
        // Predicated region
        $region45: #{tpu_custom_call.1} parent=11 // pred_check
          %p500 = pneg %p248
        $region46: #{tpu_custom_call.1} parent=11 // pred_check_branch
          %502 = sbr.rel (%p500) target = $region48
        $region47: #{tpu_custom_call.1} parent=11 // pred_region
          %s504 = ssub.s32 1024, 1024
          %505 = vsyncadd [#allocation12], %s504
          %s506 = sshll.u32 [#allocation11], 4
          %s507 = int_to_ptr.vmem [resolvable:$true] %s506
          %512 = dma.hbm_to_vmem [thread:$0]  %s9, 1024, %s507, [#allocation12], 64, 64, 4
        $region48: #{tpu_custom_call.1} parent=11 // pred_fallthru
          _
        // Predicated region
        $region49: #{tpu_custom_call.1} parent=11 // pred_check
          %p513 = pneg %p269
        $region50: #{tpu_custom_call.1} parent=11 // pred_check_branch
          %515 = sbr.rel (%p513) target = $region52
        $region51: #{tpu_custom_call.1} parent=11 // pred_region
          _
        $region52: #{tpu_custom_call.1} parent=11 // pred_fallthru
          _
        // Predicated region
        $region53: #{tpu_custom_call.1} parent=11 // pred_check
          %p516 = pneg %p290
        $region54: #{tpu_custom_call.1} parent=11 // pred_check_branch
          %518 = sbr.rel (%p516) target = $region56
        $region55: #{tpu_custom_call.1} parent=11 // pred_region
          _
        $region56: #{tpu_custom_call.1} parent=11 // pred_fallthru
          _
        // Predicated region
        $region57: #{tpu_custom_call.1} parent=11 // pred_check
          %p519 = pneg %p311
        $region58: #{tpu_custom_call.1} parent=11 // pred_check_branch
          %521 = sbr.rel (%p519) target = $region60
        $region59: #{tpu_custom_call.1} parent=11 // pred_region
          _
        $region60: #{tpu_custom_call.1} parent=11 // pred_fallthru
          _
        // Predicated region
        $region61: #{tpu_custom_call.1} parent=11 // pred_check
          %p522 = pneg %p332
        $region62: #{tpu_custom_call.1} parent=11 // pred_check_branch
          %524 = sbr.rel (%p522) target = $region64
        $region63: #{tpu_custom_call.1} parent=11 // pred_region
          %s526 = ssub.s32 1024, 1024
          %527 = vsyncadd [#allocation12], %s526
          %s528 = sshll.u32 [#allocation13], 4
          %s529 = int_to_ptr.vmem [resolvable:$true] %s528
          %534 = dma.hbm_to_vmem [thread:$0]  %s13, 1024, %s529, [#allocation12], 64, 64, 4
        $region64: #{tpu_custom_call.1} parent=11 // pred_fallthru
          _
        // Predicated region
        $region65: #{tpu_custom_call.1} parent=11 // pred_check
          %p535 = pneg %p353
        $region66: #{tpu_custom_call.1} parent=11 // pred_check_branch
          %537 = sbr.rel (%p535) target = $region68
        $region67: #{tpu_custom_call.1} parent=11 // pred_region
          _
        $region68: #{tpu_custom_call.1} parent=11 // pred_fallthru
          _
        // Predicated region
        $region69: #{tpu_custom_call.1} parent=11 // pred_check
          %p538 = pneg %p374
        $region70: #{tpu_custom_call.1} parent=11 // pred_check_branch
          %540 = sbr.rel (%p538) target = $region72
        $region71: #{tpu_custom_call.1} parent=11 // pred_region
          %s542 = ssub.s32 1024, 1024
          %543 = vsyncadd [#allocation15], %s542
          %s544 = sshll.u32 [#allocation14], 4
          %s545 = int_to_ptr.vmem [resolvable:$true] %s544
          %550 = dma.hbm_to_vmem [thread:$0]  %s15, 1024, %s545, [#allocation15], 64, 64, 4
        $region72: #{tpu_custom_call.1} parent=11 // pred_fallthru
          _
        // Predicated region
        $region73: #{tpu_custom_call.1} parent=11 // pred_check
          %p551 = pneg %p395
        $region74: #{tpu_custom_call.1} parent=11 // pred_check_branch
          %553 = sbr.rel (%p551) target = $region76
        $region75: #{tpu_custom_call.1} parent=11 // pred_region
          _
        $region76: #{tpu_custom_call.1} parent=11 // pred_fallthru
          _
      $region12: #{tpu_custom_call.1} parent=5 // pred_fallthru
        _
      %p554 = scmp.lt.s32.totalorder %s33, 2
      // Predicated region
      $region77: #{tpu_custom_call.1} parent=5 // pred_check
        %p555 = pneg %p554
      $region78: #{tpu_custom_call.1} parent=5 // pred_check_branch
        %557 = sbr.rel (%p555) target = $region80
      $region79: #{tpu_custom_call.1} parent=5 // pred_region
        // Predicated region
        $region81: #{tpu_custom_call.1} parent=79 // pred_check
          %p558 = pneg %p53
        $region82: #{tpu_custom_call.1} parent=79 // pred_check_branch
          %560 = sbr.rel (%p558) target = $region84
        $region83: #{tpu_custom_call.1} parent=79 // pred_region
          %s561 = sand.u32 %s43, 1
          %s562 = scalar_lea.sflag [#allocation3], %s561
          %s563 = sand.u32 %s43, 1
          %s564 = smul.addr %s563, 8
          %s565 = scalar_lea.vmem [#allocation2], %s564
          %s567 = ssub.s32 128, 128
          %568 = vsyncadd %s562, %s567
          %s569 = smul.addr %s33, 2
          %s570 = smul.addr %s569, 64
          %s571 = scalar_lea.hbm %s0, %s570
          %s572 = sshll.u32 %s565, 4
          %s573 = int_to_ptr.vmem [resolvable:$true] %s572
          %578 = dma.hbm_to_vmem [thread:$0]  %s571, 128, %s573, %s562, 64, 64, 4
        $region84: #{tpu_custom_call.1} parent=79 // pred_fallthru
          _
      $region80: #{tpu_custom_call.1} parent=5 // pred_fallthru
        _
      %p579 = scmp.le.s32.totalorder 1, %s33
      %p580 = scmp.lt.s32.totalorder %s33, 3
      %p581 = pnand %p579, %p580
      %p582 = pneg %p581
      // Predicated region
      $region85: #{tpu_custom_call.1} parent=5 // pred_check
        _
      $region86: #{tpu_custom_call.1} parent=5 // pred_check_branch
        %584 = sbr.rel (%p581) target = $region88
      $region87: #{tpu_custom_call.1} parent=5 // pred_region
        %s585 = ssub.s32 %s33, 1
        %s586 = sand.u32 %s46, 1
        %s587 = scalar_lea.sflag [#allocation3], %s586
        %s588 = sand.u32 %s46, 1
        %s589 = smul.addr %s588, 8
        %s590 = scalar_lea.vmem [#allocation2], %s589
        // Predicated region
        $region89: #{tpu_custom_call.1} parent=87 // pred_check
          %p591 = pneg %p59
        $region90: #{tpu_custom_call.1} parent=87 // pred_check_branch
          %593 = sbr.rel (%p591) target = $region92
        $region91: #{tpu_custom_call.1} parent=87 // pred_region
          %594 = dma.done %s587, 128
        $region92: #{tpu_custom_call.1} parent=87 // pred_fallthru
          _
        // Predicated region
        $region93: #{tpu_custom_call.1} parent=87 // pred_check
          %p595 = pneg %p80
        $region94: #{tpu_custom_call.1} parent=87 // pred_check_branch
          %597 = sbr.rel (%p595) target = $region96
        $region95: #{tpu_custom_call.1} parent=87 // pred_region
          %598 = dma.done [#allocation6], 1024
        $region96: #{tpu_custom_call.1} parent=87 // pred_fallthru
          _
        // Predicated region
        $region97: #{tpu_custom_call.1} parent=87 // pred_check
          %p599 = pneg %p122
        $region98: #{tpu_custom_call.1} parent=87 // pred_check_branch
          %601 = sbr.rel (%p599) target = $region100
        $region99: #{tpu_custom_call.1} parent=87 // pred_region
          %602 = dma.done [#allocation6], 1024
        $region100: #{tpu_custom_call.1} parent=87 // pred_fallthru
          _
        // Predicated region
        $region101: #{tpu_custom_call.1} parent=87 // pred_check
          %p603 = pneg %p164
        $region102: #{tpu_custom_call.1} parent=87 // pred_check_branch
          %605 = sbr.rel (%p603) target = $region104
        $region103: #{tpu_custom_call.1} parent=87 // pred_region
          %606 = dma.done [#allocation9], 1024
        $region104: #{tpu_custom_call.1} parent=87 // pred_fallthru
          _
        // Predicated region
        $region105: #{tpu_custom_call.1} parent=87 // pred_check
          %p607 = pneg %p206
        $region106: #{tpu_custom_call.1} parent=87 // pred_check_branch
          %609 = sbr.rel (%p607) target = $region108
        $region107: #{tpu_custom_call.1} parent=87 // pred_region
          %610 = dma.done [#allocation9], 1024
        $region108: #{tpu_custom_call.1} parent=87 // pred_fallthru
          _
        // Predicated region
        $region109: #{tpu_custom_call.1} parent=87 // pred_check
          %p611 = pneg %p248
        $region110: #{tpu_custom_call.1} parent=87 // pred_check_branch
          %613 = sbr.rel (%p611) target = $region112
        $region111: #{tpu_custom_call.1} parent=87 // pred_region
          %614 = dma.done [#allocation12], 1024
        $region112: #{tpu_custom_call.1} parent=87 // pred_fallthru
          _
        // Predicated region
        $region113: #{tpu_custom_call.1} parent=87 // pred_check
          %p615 = pneg %p332
        $region114: #{tpu_custom_call.1} parent=87 // pred_check_branch
          %617 = sbr.rel (%p615) target = $region116
        $region115: #{tpu_custom_call.1} parent=87 // pred_region
          %618 = dma.done [#allocation12], 1024
        $region116: #{tpu_custom_call.1} parent=87 // pred_fallthru
          _
        // Predicated region
        $region117: #{tpu_custom_call.1} parent=87 // pred_check
          %p619 = pneg %p374
        $region118: #{tpu_custom_call.1} parent=87 // pred_check_branch
          %621 = sbr.rel (%p619) target = $region120
        $region119: #{tpu_custom_call.1} parent=87 // pred_region
          %622 = dma.done [#allocation15], 1024
        $region120: #{tpu_custom_call.1} parent=87 // pred_fallthru
          _
        %s623 = sand.u32 %s46, 1
        %s624 = scalar_lea.sflag [#allocation3], %s623
        %s625 = sand.u32 %s46, 1
        %s626 = smul.addr %s625, 8
        %s627 = scalar_lea.vmem [#allocation2], %s626
        %p628 = pneg %p59
        %p629 = pneg %p56
        %p630 = pneg %p80
        %p631 = pneg %p77
        %p632 = pneg %p101
        %p633 = pneg %p98
        %p634 = pneg %p122
        %p635 = pneg %p119
        %p636 = pneg %p143
        %p637 = pneg %p140
        %p638 = pneg %p164
        %p639 = pneg %p161
        %p640 = pneg %p185
        %p641 = pneg %p182
        %p642 = pneg %p206
        %p643 = pneg %p203
        %p644 = pneg %p227
        %p645 = pneg %p224
        %p646 = pneg %p248
        %p647 = pneg %p245
        %p648 = pneg %p269
        %p649 = pneg %p266
        %p650 = pneg %p290
        %p651 = pneg %p287
        %p652 = pneg %p311
        %p653 = pneg %p308
        %p654 = pneg %p332
        %p655 = pneg %p329
        %p656 = pneg %p353
        %p657 = pneg %p350
        %p658 = pneg %p374
        %p659 = pneg %p371
        %p660 = pneg %p395
        %p661 = pneg %p392
        %p662 = pneg %p421
        %p663 = pneg %p418
        %s664 = sand.u32 %s408, 1
        %s665 = scalar_lea.sflag [#allocation4], %s664
        %s666 = sand.u32 %s408, 1
        %s667 = smul.addr %s666, 16
        %s668 = scalar_lea.vmem [#allocation16], %s667
        %v670 = vld [vmem:[%s590] sm:$0xf]
        %v671 = vld [vmem:[%s590 + $0x4] sm:$0xf]
        %v672 = vld [vmem:[#allocation5] sm:$0xf]
        %v673 = vld [vmem:[#allocation5 + $0x4] sm:$0xf]
        %v674 = vld [vmem:[#allocation5 + $0x8] sm:$0xf]
        %v675 = vld [vmem:[#allocation5 + $0xc] sm:$0xf]
        %v676 = vld [vmem:[#allocation5 + $0x10] sm:$0xf]
        %v677 = vld [vmem:[#allocation5 + $0x14] sm:$0xf]
        %v678 = vld [vmem:[#allocation5 + $0x18] sm:$0xf]
        %v679 = vld [vmem:[#allocation5 + $0x1c] sm:$0xf]
        %v680 = vld [vmem:[#allocation5 + $0x20] sm:$0xf]
        %v681 = vld [vmem:[#allocation5 + $0x24] sm:$0xf]
        %v682 = vld [vmem:[#allocation5 + $0x28] sm:$0xf]
        %v683 = vld [vmem:[#allocation5 + $0x2c] sm:$0xf]
        %v684 = vld [vmem:[#allocation5 + $0x30] sm:$0xf]
        %v685 = vld [vmem:[#allocation5 + $0x34] sm:$0xf]
        %v686 = vld [vmem:[#allocation5 + $0x38] sm:$0xf]
        %v687 = vld [vmem:[#allocation5 + $0x3c] sm:$0xf]
        %v688 = vld [vmem:[%s2] sm:$0x1]
        %v690 = vlaneseq
        %v691 = vshrl.u32 %v690, 7
        %v692 = vsub.s32 0, %v691
        %v693 = vrot.slane %v688, %v692
        %v697 = vunpack.c.l.b16 %v670
        %v698 = vunpack.c.l.b16 %v671
        %v699 = vpack.c.b16 %v698, %v697
        %v717 = vunpack.c.l.b16 %v672
        %v718 = vunpack.c.l.b16 %v673
        %v719 = vunpack.c.l.b16 %v674
        %v720 = vunpack.c.l.b16 %v675
        %v721 = vunpack.c.l.b16 %v676
        %v722 = vunpack.c.l.b16 %v677
        %v723 = vunpack.c.l.b16 %v678
        %v724 = vunpack.c.l.b16 %v679
        %v725 = vunpack.c.l.b16 %v680
        %v726 = vunpack.c.l.b16 %v681
        %v727 = vunpack.c.l.b16 %v682
        %v728 = vunpack.c.l.b16 %v683
        %v729 = vunpack.c.l.b16 %v684
        %v730 = vunpack.c.l.b16 %v685
        %v731 = vunpack.c.l.b16 %v686
        %v732 = vunpack.c.l.b16 %v687
        %v733 = vpack.c.b16 %v718, %v717
        %v734 = vpack.c.b16 %v720, %v719
        %v735 = vpack.c.b16 %v722, %v721
        %v736 = vpack.c.b16 %v724, %v723
        %v737 = vpack.c.b16 %v726, %v725
        %v738 = vpack.c.b16 %v728, %v727
        %v739 = vpack.c.b16 %v730, %v729
        %v740 = vpack.c.b16 %v732, %v731
        %749 = vmatprep.subr.bf16.mxu0 0
        %750 = vmatpush1.bf16.msra.mxu0 %v740
        %751 = vmatprep.subr.bf16.mxu0 0
        %752 = vmatpush1.bf16.msra.mxu0 %v739
        %753 = vmatprep.subr.bf16.mxu0 0
        %754 = vmatpush1.bf16.msra.mxu0 %v738
        %755 = vmatprep.subr.bf16.mxu0 0
        %756 = vmatpush1.bf16.msra.mxu0 %v737
        %757 = vmatprep.subr.bf16.mxu0 0
        %758 = vmatpush1.bf16.msra.mxu0 %v736
        %759 = vmatprep.subr.bf16.mxu0 0
        %760 = vmatpush1.bf16.msra.mxu0 %v735
        %761 = vmatprep.subr.bf16.mxu0 0
        %762 = vmatpush1.bf16.msra.mxu0 %v734
        %763 = vmatprep.subr.bf16.mxu0 0
        %764 = vmatpush1.bf16.msra.mxu0 %v733
        %765 = vmatprep.subr.bf16.mxu0 0
        %766 = vmatpush2.bf16.msra.mxu0 0
        %767 = vmatprep.subr.bf16.mxu0 0
        %768 = vmatpush2.bf16.msra.mxu0 0
        %769 = vmatprep.subr.bf16.mxu0 0
        %770 = vmatpush2.bf16.msra.mxu0 0
        %771 = vmatprep.subr.bf16.mxu0 0
        %772 = vmatpush2.bf16.msra.mxu0 0
        %773 = vmatprep.subr.bf16.mxu0 0
        %774 = vmatpush2.bf16.msra.mxu0 0
        %775 = vmatprep.subr.bf16.mxu0 0
        %776 = vmatpush2.bf16.msra.mxu0 0
        %777 = vmatprep.subr.bf16.mxu0 0
        %778 = vmatpush2.bf16.msra.mxu0 0
        %779 = vmatprep.subr.bf16.mxu0 0
        %780 = vmatpush2.bf16.msra.mxu0 0
        %781 = vmatprep.mubr.bf16.mxu0 0
        %782 = vmatmul.mubr.bf16.gmra.mxu0 %v699
        %v783 = vpop.f32.mrf.mxu0
        %v784 = vadd.f32 %v693, %v783
        %v785 = vpop.f32.mrf.mxu0
        %v786 = vpop.f32.mrf.mxu0
        %v787 = vadd.f32 %v693, %v786
        %v788 = vpop.f32.mrf.mxu0
        %789 = vdwg.mxu0
        %v790 = vmul.f32 %v784, 0.5
        %v791 = vmul.f32 %v787, 0.5
        %v792 = vrcp.pop 1.4142135
        %v793 = vmul.f32 %v784, %v792
        %v794 = vmul.f32 %v787, %v792
        %v795 = verf.f32.pop %v793
        %v796 = verf.f32.pop %v794
        %v797 = vadd.f32 %v795, 1.0
        %v798 = vadd.f32 %v796, 1.0
        %v799 = vmul.f32 %v790, %v797
        %v800 = vmul.f32 %v791, %v798
        %v801 = vld [vmem:[#allocation7] sm:$0xf]
        %v802 = vld [vmem:[#allocation7 + $0x4] sm:$0xf]
        %v803 = vld [vmem:[#allocation7 + $0x8] sm:$0xf]
        %v804 = vld [vmem:[#allocation7 + $0xc] sm:$0xf]
        %v805 = vld [vmem:[#allocation7 + $0x10] sm:$0xf]
        %v806 = vld [vmem:[#allocation7 + $0x14] sm:$0xf]
        %v807 = vld [vmem:[#allocation7 + $0x18] sm:$0xf]
        %v808 = vld [vmem:[#allocation7 + $0x1c] sm:$0xf]
        %v809 = vld [vmem:[#allocation7 + $0x20] sm:$0xf]
        %v810 = vld [vmem:[#allocation7 + $0x24] sm:$0xf]
        %v811 = vld [vmem:[#allocation7 + $0x28] sm:$0xf]
        %v812 = vld [vmem:[#allocation7 + $0x2c] sm:$0xf]
        %v813 = vld [vmem:[#allocation7 + $0x30] sm:$0xf]
        %v814 = vld [vmem:[#allocation7 + $0x34] sm:$0xf]
        %v815 = vld [vmem:[#allocation7 + $0x38] sm:$0xf]
        %v816 = vld [vmem:[#allocation7 + $0x3c] sm:$0xf]
        %v817 = vld [vmem:[%s4] sm:$0x1]
        %v818 = vpack.c.bf16 %v800, %v799
        %v820 = vlaneseq
        %v821 = vshrl.u32 %v820, 7
        %v822 = vsub.s32 0, %v821
        %v823 = vrot.slane %v817, %v822
        %v841 = vunpack.c.l.b16 %v801
        %v842 = vunpack.c.l.b16 %v802
        %v843 = vunpack.c.l.b16 %v803
        %v844 = vunpack.c.l.b16 %v804
        %v845 = vunpack.c.l.b16 %v805
        %v846 = vunpack.c.l.b16 %v806
        %v847 = vunpack.c.l.b16 %v807
        %v848 = vunpack.c.l.b16 %v808
        %v849 = vunpack.c.l.b16 %v809
        %v850 = vunpack.c.l.b16 %v810
        %v851 = vunpack.c.l.b16 %v811
        %v852 = vunpack.c.l.b16 %v812
        %v853 = vunpack.c.l.b16 %v813
        %v854 = vunpack.c.l.b16 %v814
        %v855 = vunpack.c.l.b16 %v815
        %v856 = vunpack.c.l.b16 %v816
        %v857 = vpack.c.b16 %v842, %v841
        %v858 = vpack.c.b16 %v844, %v843
        %v859 = vpack.c.b16 %v846, %v845
        %v860 = vpack.c.b16 %v848, %v847
        %v861 = vpack.c.b16 %v850, %v849
        %v862 = vpack.c.b16 %v852, %v851
        %v863 = vpack.c.b16 %v854, %v853
        %v864 = vpack.c.b16 %v856, %v855
        %873 = vmatprep.subr.bf16.mxu0 0
        %874 = vmatpush1.bf16.msra.mxu0 %v864
        %875 = vmatprep.subr.bf16.mxu0 0
        %876 = vmatpush1.bf16.msra.mxu0 %v863
        %877 = vmatprep.subr.bf16.mxu0 0
        %878 = vmatpush1.bf16.msra.mxu0 %v862
        %879 = vmatprep.subr.bf16.mxu0 0
        %880 = vmatpush1.bf16.msra.mxu0 %v861
        %881 = vmatprep.subr.bf16.mxu0 0
        %882 = vmatpush1.bf16.msra.mxu0 %v860
        %883 = vmatprep.subr.bf16.mxu0 0
        %884 = vmatpush1.bf16.msra.mxu0 %v859
        %885 = vmatprep.subr.bf16.mxu0 0
        %886 = vmatpush1.bf16.msra.mxu0 %v858
        %887 = vmatprep.subr.bf16.mxu0 0
        %888 = vmatpush1.bf16.msra.mxu0 %v857
        %889 = vmatprep.subr.bf16.mxu0 0
        %890 = vmatpush2.bf16.msra.mxu0 0
        %891 = vmatprep.subr.bf16.mxu0 0
        %892 = vmatpush2.bf16.msra.mxu0 0
        %893 = vmatprep.subr.bf16.mxu0 0
        %894 = vmatpush2.bf16.msra.mxu0 0
        %895 = vmatprep.subr.bf16.mxu0 0
        %896 = vmatpush2.bf16.msra.mxu0 0
        %897 = vmatprep.subr.bf16.mxu0 0
        %898 = vmatpush2.bf16.msra.mxu0 0
        %899 = vmatprep.subr.bf16.mxu0 0
        %900 = vmatpush2.bf16.msra.mxu0 0
        %901 = vmatprep.subr.bf16.mxu0 0
        %902 = vmatpush2.bf16.msra.mxu0 0
        %903 = vmatprep.subr.bf16.mxu0 0
        %904 = vmatpush2.bf16.msra.mxu0 0
        %905 = vmatprep.mubr.bf16.mxu0 0
        %906 = vmatmul.mubr.bf16.gmra.mxu0 %v818
        %v907 = vpop.f32.mrf.mxu0
        %v908 = vadd.f32 %v823, %v907
        %v909 = vpop.f32.mrf.mxu0
        %v910 = vpop.f32.mrf.mxu0
        %v911 = vadd.f32 %v823, %v910
        %v912 = vpop.f32.mrf.mxu0
        %913 = vdwg.mxu0
        %v914 = vmul.f32 %v908, 0.5
        %v915 = vmul.f32 %v911, 0.5
        %v916 = vmul.f32 %v908, %v792
        %v917 = vmul.f32 %v911, %v792
        %v918 = verf.f32.pop %v916
        %v919 = verf.f32.pop %v917
        %v920 = vadd.f32 %v918, 1.0
        %v921 = vadd.f32 %v919, 1.0
        %v922 = vmul.f32 %v914, %v920
        %v923 = vmul.f32 %v915, %v921
        %v924 = vld [vmem:[#allocation8] sm:$0xf]
        %v925 = vld [vmem:[#allocation8 + $0x4] sm:$0xf]
        %v926 = vld [vmem:[#allocation8 + $0x8] sm:$0xf]
        %v927 = vld [vmem:[#allocation8 + $0xc] sm:$0xf]
        %v928 = vld [vmem:[#allocation8 + $0x10] sm:$0xf]
        %v929 = vld [vmem:[#allocation8 + $0x14] sm:$0xf]
        %v930 = vld [vmem:[#allocation8 + $0x18] sm:$0xf]
        %v931 = vld [vmem:[#allocation8 + $0x1c] sm:$0xf]
        %v932 = vld [vmem:[#allocation8 + $0x20] sm:$0xf]
        %v933 = vld [vmem:[#allocation8 + $0x24] sm:$0xf]
        %v934 = vld [vmem:[#allocation8 + $0x28] sm:$0xf]
        %v935 = vld [vmem:[#allocation8 + $0x2c] sm:$0xf]
        %v936 = vld [vmem:[#allocation8 + $0x30] sm:$0xf]
        %v937 = vld [vmem:[#allocation8 + $0x34] sm:$0xf]
        %v938 = vld [vmem:[#allocation8 + $0x38] sm:$0xf]
        %v939 = vld [vmem:[#allocation8 + $0x3c] sm:$0xf]
        %v940 = vld [vmem:[%s6] sm:$0x1]
        %v941 = vpack.c.bf16 %v923, %v922
        %v943 = vlaneseq
        %v944 = vshrl.u32 %v943, 7
        %v945 = vsub.s32 0, %v944
        %v946 = vrot.slane %v940, %v945
        %v964 = vunpack.c.l.b16 %v924
        %v965 = vunpack.c.l.b16 %v925
        %v966 = vunpack.c.l.b16 %v926
        %v967 = vunpack.c.l.b16 %v927
        %v968 = vunpack.c.l.b16 %v928
        %v969 = vunpack.c.l.b16 %v929
        %v970 = vunpack.c.l.b16 %v930
        %v971 = vunpack.c.l.b16 %v931
        %v972 = vunpack.c.l.b16 %v932
        %v973 = vunpack.c.l.b16 %v933
        %v974 = vunpack.c.l.b16 %v934
        %v975 = vunpack.c.l.b16 %v935
        %v976 = vunpack.c.l.b16 %v936
        %v977 = vunpack.c.l.b16 %v937
        %v978 = vunpack.c.l.b16 %v938
        %v979 = vunpack.c.l.b16 %v939
        %v980 = vpack.c.b16 %v965, %v964
        %v981 = vpack.c.b16 %v967, %v966
        %v982 = vpack.c.b16 %v969, %v968
        %v983 = vpack.c.b16 %v971, %v970
        %v984 = vpack.c.b16 %v973, %v972
        %v985 = vpack.c.b16 %v975, %v974
        %v986 = vpack.c.b16 %v977, %v976
        %v987 = vpack.c.b16 %v979, %v978
        %996 = vmatprep.subr.bf16.mxu0 0
        %997 = vmatpush1.bf16.msra.mxu0 %v987
        %998 = vmatprep.subr.bf16.mxu0 0
        %999 = vmatpush1.bf16.msra.mxu0 %v986
        %1000 = vmatprep.subr.bf16.mxu0 0
        %1001 = vmatpush1.bf16.msra.mxu0 %v985
        %1002 = vmatprep.subr.bf16.mxu0 0
        %1003 = vmatpush1.bf16.msra.mxu0 %v984
        %1004 = vmatprep.subr.bf16.mxu0 0
        %1005 = vmatpush1.bf16.msra.mxu0 %v983
        %1006 = vmatprep.subr.bf16.mxu0 0
        %1007 = vmatpush1.bf16.msra.mxu0 %v982
        %1008 = vmatprep.subr.bf16.mxu0 0
        %1009 = vmatpush1.bf16.msra.mxu0 %v981
        %1010 = vmatprep.subr.bf16.mxu0 0
        %1011 = vmatpush1.bf16.msra.mxu0 %v980
        %1012 = vmatprep.subr.bf16.mxu0 0
        %1013 = vmatpush2.bf16.msra.mxu0 0
        %1014 = vmatprep.subr.bf16.mxu0 0
        %1015 = vmatpush2.bf16.msra.mxu0 0
        %1016 = vmatprep.subr.bf16.mxu0 0
        %1017 = vmatpush2.bf16.msra.mxu0 0
        %1018 = vmatprep.subr.bf16.mxu0 0
        %1019 = vmatpush2.bf16.msra.mxu0 0
        %1020 = vmatprep.subr.bf16.mxu0 0
        %1021 = vmatpush2.bf16.msra.mxu0 0
        %1022 = vmatprep.subr.bf16.mxu0 0
        %1023 = vmatpush2.bf16.msra.mxu0 0
        %1024 = vmatprep.subr.bf16.mxu0 0
        %1025 = vmatpush2.bf16.msra.mxu0 0
        %1026 = vmatprep.subr.bf16.mxu0 0
        %1027 = vmatpush2.bf16.msra.mxu0 0
        %1028 = vmatprep.mubr.bf16.mxu0 0
        %1029 = vmatmul.mubr.bf16.gmra.mxu0 %v941
        %v1030 = vpop.f32.mrf.mxu0
        %v1031 = vadd.f32 %v946, %v1030
        %v1032 = vpop.f32.mrf.mxu0
        %v1033 = vpop.f32.mrf.mxu0
        %v1034 = vadd.f32 %v946, %v1033
        %v1035 = vpop.f32.mrf.mxu0
        %1036 = vdwg.mxu0
        %v1037 = vmul.f32 %v1031, 0.5
        %v1038 = vmul.f32 %v1034, 0.5
        %v1039 = vmul.f32 %v1031, %v792
        %v1040 = vmul.f32 %v1034, %v792
        %v1041 = verf.f32.pop %v1039
        %v1042 = verf.f32.pop %v1040
        %v1043 = vadd.f32 %v1041, 1.0
        %v1044 = vadd.f32 %v1042, 1.0
        %v1045 = vmul.f32 %v1037, %v1043
        %v1046 = vmul.f32 %v1038, %v1044
        %v1047 = vld [vmem:[#allocation10] sm:$0xf]
        %v1048 = vld [vmem:[#allocation10 + $0x4] sm:$0xf]
        %v1049 = vld [vmem:[#allocation10 + $0x8] sm:$0xf]
        %v1050 = vld [vmem:[#allocation10 + $0xc] sm:$0xf]
        %v1051 = vld [vmem:[#allocation10 + $0x10] sm:$0xf]
        %v1052 = vld [vmem:[#allocation10 + $0x14] sm:$0xf]
        %v1053 = vld [vmem:[#allocation10 + $0x18] sm:$0xf]
        %v1054 = vld [vmem:[#allocation10 + $0x1c] sm:$0xf]
        %v1055 = vld [vmem:[#allocation10 + $0x20] sm:$0xf]
        %v1056 = vld [vmem:[#allocation10 + $0x24] sm:$0xf]
        %v1057 = vld [vmem:[#allocation10 + $0x28] sm:$0xf]
        %v1058 = vld [vmem:[#allocation10 + $0x2c] sm:$0xf]
        %v1059 = vld [vmem:[#allocation10 + $0x30] sm:$0xf]
        %v1060 = vld [vmem:[#allocation10 + $0x34] sm:$0xf]
        %v1061 = vld [vmem:[#allocation10 + $0x38] sm:$0xf]
        %v1062 = vld [vmem:[#allocation10 + $0x3c] sm:$0xf]
        %v1063 = vld [vmem:[%s8] sm:$0x1]
        %v1064 = vpack.c.bf16 %v1046, %v1045
        %v1066 = vlaneseq
        %v1067 = vshrl.u32 %v1066, 7
        %v1068 = vsub.s32 0, %v1067
        %v1069 = vrot.slane %v1063, %v1068
        %v1087 = vunpack.c.l.b16 %v1047
        %v1088 = vunpack.c.l.b16 %v1048
        %v1089 = vunpack.c.l.b16 %v1049
        %v1090 = vunpack.c.l.b16 %v1050
        %v1091 = vunpack.c.l.b16 %v1051
        %v1092 = vunpack.c.l.b16 %v1052
        %v1093 = vunpack.c.l.b16 %v1053
        %v1094 = vunpack.c.l.b16 %v1054
        %v1095 = vunpack.c.l.b16 %v1055
        %v1096 = vunpack.c.l.b16 %v1056
        %v1097 = vunpack.c.l.b16 %v1057
        %v1098 = vunpack.c.l.b16 %v1058
        %v1099 = vunpack.c.l.b16 %v1059
        %v1100 = vunpack.c.l.b16 %v1060
        %v1101 = vunpack.c.l.b16 %v1061
        %v1102 = vunpack.c.l.b16 %v1062
        %v1103 = vpack.c.b16 %v1088, %v1087
        %v1104 = vpack.c.b16 %v1090, %v1089
        %v1105 = vpack.c.b16 %v1092, %v1091
        %v1106 = vpack.c.b16 %v1094, %v1093
        %v1107 = vpack.c.b16 %v1096, %v1095
        %v1108 = vpack.c.b16 %v1098, %v1097
        %v1109 = vpack.c.b16 %v1100, %v1099
        %v1110 = vpack.c.b16 %v1102, %v1101
        %1119 = vmatprep.subr.bf16.mxu0 0
        %1120 = vmatpush1.bf16.msra.mxu0 %v1110
        %1121 = vmatprep.subr.bf16.mxu0 0
        %1122 = vmatpush1.bf16.msra.mxu0 %v1109
        %1123 = vmatprep.subr.bf16.mxu0 0
        %1124 = vmatpush1.bf16.msra.mxu0 %v1108
        %1125 = vmatprep.subr.bf16.mxu0 0
        %1126 = vmatpush1.bf16.msra.mxu0 %v1107
        %1127 = vmatprep.subr.bf16.mxu0 0
        %1128 = vmatpush1.bf16.msra.mxu0 %v1106
        %1129 = vmatprep.subr.bf16.mxu0 0
        %1130 = vmatpush1.bf16.msra.mxu0 %v1105
        %1131 = vmatprep.subr.bf16.mxu0 0
        %1132 = vmatpush1.bf16.msra.mxu0 %v1104
        %1133 = vmatprep.subr.bf16.mxu0 0
        %1134 = vmatpush1.bf16.msra.mxu0 %v1103
        %1135 = vmatprep.subr.bf16.mxu0 0
        %1136 = vmatpush2.bf16.msra.mxu0 0
        %1137 = vmatprep.subr.bf16.mxu0 0
        %1138 = vmatpush2.bf16.msra.mxu0 0
        %1139 = vmatprep.subr.bf16.mxu0 0
        %1140 = vmatpush2.bf16.msra.mxu0 0
        %1141 = vmatprep.subr.bf16.mxu0 0
        %1142 = vmatpush2.bf16.msra.mxu0 0
        %1143 = vmatprep.subr.bf16.mxu0 0
        %1144 = vmatpush2.bf16.msra.mxu0 0
        %1145 = vmatprep.subr.bf16.mxu0 0
        %1146 = vmatpush2.bf16.msra.mxu0 0
        %1147 = vmatprep.subr.bf16.mxu0 0
        %1148 = vmatpush2.bf16.msra.mxu0 0
        %1149 = vmatprep.subr.bf16.mxu0 0
        %1150 = vmatpush2.bf16.msra.mxu0 0
        %1151 = vmatprep.mubr.bf16.mxu0 0
        %1152 = vmatmul.mubr.bf16.gmra.mxu0 %v1064
        %v1153 = vpop.f32.mrf.mxu0
        %v1154 = vadd.f32 %v1069, %v1153
        %v1155 = vpop.f32.mrf.mxu0
        %v1156 = vpop.f32.mrf.mxu0
        %v1157 = vadd.f32 %v1069, %v1156
        %v1158 = vpop.f32.mrf.mxu0
        %1159 = vdwg.mxu0
        %v1160 = vmul.f32 %v1154, 0.5
        %v1161 = vmul.f32 %v1157, 0.5
        %v1162 = vmul.f32 %v1154, %v792
        %v1163 = vmul.f32 %v1157, %v792
        %v1164 = verf.f32.pop %v1162
        %v1165 = verf.f32.pop %v1163
        %v1166 = vadd.f32 %v1164, 1.0
        %v1167 = vadd.f32 %v1165, 1.0
        %v1168 = vmul.f32 %v1160, %v1166
        %v1169 = vmul.f32 %v1161, %v1167
        %v1170 = vld [vmem:[#allocation11] sm:$0xf]
        %v1171 = vld [vmem:[#allocation11 + $0x4] sm:$0xf]
        %v1172 = vld [vmem:[#allocation11 + $0x8] sm:$0xf]
        %v1173 = vld [vmem:[#allocation11 + $0xc] sm:$0xf]
        %v1174 = vld [vmem:[#allocation11 + $0x10] sm:$0xf]
        %v1175 = vld [vmem:[#allocation11 + $0x14] sm:$0xf]
        %v1176 = vld [vmem:[#allocation11 + $0x18] sm:$0xf]
        %v1177 = vld [vmem:[#allocation11 + $0x1c] sm:$0xf]
        %v1178 = vld [vmem:[#allocation11 + $0x20] sm:$0xf]
        %v1179 = vld [vmem:[#allocation11 + $0x24] sm:$0xf]
        %v1180 = vld [vmem:[#allocation11 + $0x28] sm:$0xf]
        %v1181 = vld [vmem:[#allocation11 + $0x2c] sm:$0xf]
        %v1182 = vld [vmem:[#allocation11 + $0x30] sm:$0xf]
        %v1183 = vld [vmem:[#allocation11 + $0x34] sm:$0xf]
        %v1184 = vld [vmem:[#allocation11 + $0x38] sm:$0xf]
        %v1185 = vld [vmem:[#allocation11 + $0x3c] sm:$0xf]
        %v1186 = vld [vmem:[%s10] sm:$0x1]
        %v1187 = vpack.c.bf16 %v1169, %v1168
        %v1189 = vlaneseq
        %v1190 = vshrl.u32 %v1189, 7
        %v1191 = vsub.s32 0, %v1190
        %v1192 = vrot.slane %v1186, %v1191
        %v1210 = vunpack.c.l.b16 %v1170
        %v1211 = vunpack.c.l.b16 %v1171
        %v1212 = vunpack.c.l.b16 %v1172
        %v1213 = vunpack.c.l.b16 %v1173
        %v1214 = vunpack.c.l.b16 %v1174
        %v1215 = vunpack.c.l.b16 %v1175
        %v1216 = vunpack.c.l.b16 %v1176
        %v1217 = vunpack.c.l.b16 %v1177
        %v1218 = vunpack.c.l.b16 %v1178
        %v1219 = vunpack.c.l.b16 %v1179
        %v1220 = vunpack.c.l.b16 %v1180
        %v1221 = vunpack.c.l.b16 %v1181
        %v1222 = vunpack.c.l.b16 %v1182
        %v1223 = vunpack.c.l.b16 %v1183
        %v1224 = vunpack.c.l.b16 %v1184
        %v1225 = vunpack.c.l.b16 %v1185
        %v1226 = vpack.c.b16 %v1211, %v1210
        %v1227 = vpack.c.b16 %v1213, %v1212
        %v1228 = vpack.c.b16 %v1215, %v1214
        %v1229 = vpack.c.b16 %v1217, %v1216
        %v1230 = vpack.c.b16 %v1219, %v1218
        %v1231 = vpack.c.b16 %v1221, %v1220
        %v1232 = vpack.c.b16 %v1223, %v1222
        %v1233 = vpack.c.b16 %v1225, %v1224
        %1242 = vmatprep.subr.bf16.mxu0 0
        %1243 = vmatpush1.bf16.msra.mxu0 %v1233
        %1244 = vmatprep.subr.bf16.mxu0 0
        %1245 = vmatpush1.bf16.msra.mxu0 %v1232
        %1246 = vmatprep.subr.bf16.mxu0 0
        %1247 = vmatpush1.bf16.msra.mxu0 %v1231
        %1248 = vmatprep.subr.bf16.mxu0 0
        %1249 = vmatpush1.bf16.msra.mxu0 %v1230
        %1250 = vmatprep.subr.bf16.mxu0 0
        %1251 = vmatpush1.bf16.msra.mxu0 %v1229
        %1252 = vmatprep.subr.bf16.mxu0 0
        %1253 = vmatpush1.bf16.msra.mxu0 %v1228
        %1254 = vmatprep.subr.bf16.mxu0 0
        %1255 = vmatpush1.bf16.msra.mxu0 %v1227
        %1256 = vmatprep.subr.bf16.mxu0 0
        %1257 = vmatpush1.bf16.msra.mxu0 %v1226
        %1258 = vmatprep.subr.bf16.mxu0 0
        %1259 = vmatpush2.bf16.msra.mxu0 0
        %1260 = vmatprep.subr.bf16.mxu0 0
        %1261 = vmatpush2.bf16.msra.mxu0 0
        %1262 = vmatprep.subr.bf16.mxu0 0
        %1263 = vmatpush2.bf16.msra.mxu0 0
        %1264 = vmatprep.subr.bf16.mxu0 0
        %1265 = vmatpush2.bf16.msra.mxu0 0
        %1266 = vmatprep.subr.bf16.mxu0 0
        %1267 = vmatpush2.bf16.msra.mxu0 0
        %1268 = vmatprep.subr.bf16.mxu0 0
        %1269 = vmatpush2.bf16.msra.mxu0 0
        %1270 = vmatprep.subr.bf16.mxu0 0
        %1271 = vmatpush2.bf16.msra.mxu0 0
        %1272 = vmatprep.subr.bf16.mxu0 0
        %1273 = vmatpush2.bf16.msra.mxu0 0
        %1274 = vmatprep.mubr.bf16.mxu0 0
        %1275 = vmatmul.mubr.bf16.gmra.mxu0 %v1187
        %v1276 = vpop.f32.mrf.mxu0
        %v1277 = vadd.f32 %v1192, %v1276
        %v1278 = vpop.f32.mrf.mxu0
        %v1279 = vpop.f32.mrf.mxu0
        %v1280 = vadd.f32 %v1192, %v1279
        %v1281 = vpop.f32.mrf.mxu0
        %1282 = vdwg.mxu0
        %v1283 = vld [vmem:[%s11] sm:$0x1]
        %v1284 = vld [vmem:[%s12] sm:$0x1]
        %v1285 = vadd.f32 %v1277, %v1280
        %v1286 = vrot.slane %v1285, 4
        %v1287 = vadd.f32 %v1285, %v1286
        %v1288 = vrot.slane %v1287, 2
        %v1289 = vadd.f32 %v1287, %v1288
        %v1290 = vrot.slane %v1289, 1
        %v1291 = vadd.f32 %v1289, %v1290
        %v1292 = vmul.f32 %v1277, %v1277
        %v1293 = vmul.f32 %v1280, %v1280
        %v1294 = vadd.f32 %v1292, %v1293
        %v1295 = vrot.slane %v1294, 4
        %v1296 = vadd.f32 %v1294, %v1295
        %v1297 = vrot.slane %v1296, 2
        %v1298 = vadd.f32 %v1296, %v1297
        %v1299 = vrot.slane %v1298, 1
        %v1300 = vadd.f32 %v1298, %v1299
        %v1301 = vlaneseq
        %v1302 = vand.u32 %v1301, 127
        %vm1303 = vcmp.ge.s32.totalorder %v1302, 0
        %vm1304 = vcmp.lt.s32.totalorder %v1302, 16
        %vm1305 = vmand %vm1303, %vm1304
        %v1306 = vsel %vm1305, %v1291, 0.0
        %vm1307 = vcmask 1040384
        %v1308 = vsel %vm1307, %v1306, 0.0
        %1309 = vadd.xlane.f32.xlu0 %v1308
        %v1310 = vpop.xlane.xlu0 %1309
        %v1311 = vrot.slane %v1310, 4
        %v1312 = vadd.f32 %v1310, %v1311
        %v1313 = vrot.slane %v1312, 2
        %v1314 = vadd.f32 %v1312, %v1313
        %v1315 = vrot.slane %v1314, 1
        %v1316 = vadd.f32 %v1314, %v1315
        %s1317 = vtos %v1316
        %v1318 = vstv %s1317
        %v1319 = vrcp.pop 256.0
        %v1320 = vmul.f32 %v1318, %v1319
        %v1321 = vsel %vm1305, %v1300, 0.0
        %v1322 = vsel %vm1307, %v1321, 0.0
        %1323 = vadd.xlane.f32.xlu0 %v1322
        %v1324 = vpop.xlane.xlu0 %1323
        %v1325 = vrot.slane %v1324, 4
        %v1326 = vadd.f32 %v1324, %v1325
        %v1327 = vrot.slane %v1326, 2
        %v1328 = vadd.f32 %v1326, %v1327
        %v1329 = vrot.slane %v1328, 1
        %v1330 = vadd.f32 %v1328, %v1329
        %s1331 = vtos %v1330
        %v1332 = vstv %s1331
        %v1333 = vmul.f32 %v1332, %v1319
        %v1334 = vmul.f32 %v1320, %v1320
        %v1335 = vsub.f32 %v1333, %v1334
        %v1336 = vmax.f32 %v1335, 0.0
        %v1337 = vsel %vm1305, %v1320, 0.0
        %v1338 = vadd.f32 %v1336, 1e-05
        %v1339 = vrsqrt.pop %v1338
        %v1340 = vsel %vm1305, %v1339, 0.0
        %vm1341 = vcmp.ge.s32.totalorder %v1302, 16
        %vm1342 = vcmp.lt.s32.totalorder %v1302, 32
        %vm1343 = vmand %vm1341, %vm1342
        %v1344 = vsel %vm1343, %v1291, 0.0
        %v1345 = vsel %vm1307, %v1344, 0.0
        %1346 = vadd.xlane.f32.xlu0 %v1345
        %v1347 = vpop.xlane.xlu0 %1346
        %v1348 = vrot.slane %v1347, 4
        %v1349 = vadd.f32 %v1347, %v1348
        %v1350 = vrot.slane %v1349, 2
        %v1351 = vadd.f32 %v1349, %v1350
        %v1352 = vrot.slane %v1351, 1
        %v1353 = vadd.f32 %v1351, %v1352
        %s1354 = vtos %v1353
        %v1355 = vstv %s1354
        %v1356 = vmul.f32 %v1355, %v1319
        %v1357 = vsel %vm1343, %v1300, 0.0
        %v1358 = vsel %vm1307, %v1357, 0.0
        %1359 = vadd.xlane.f32.xlu0 %v1358
        %v1360 = vpop.xlane.xlu0 %1359
        %v1361 = vrot.slane %v1360, 4
        %v1362 = vadd.f32 %v1360, %v1361
        %v1363 = vrot.slane %v1362, 2
        %v1364 = vadd.f32 %v1362, %v1363
        %v1365 = vrot.slane %v1364, 1
        %v1366 = vadd.f32 %v1364, %v1365
        %s1367 = vtos %v1366
        %v1368 = vstv %s1367
        %v1369 = vmul.f32 %v1368, %v1319
        %v1370 = vmul.f32 %v1356, %v1356
        %v1371 = vsub.f32 %v1369, %v1370
        %v1372 = vmax.f32 %v1371, 0.0
        %v1373 = vsel %vm1343, %v1356, %v1337
        %v1374 = vadd.f32 %v1372, 1e-05
        %v1375 = vrsqrt.pop %v1374
        %v1376 = vsel %vm1343, %v1375, %v1340
        %v1377 = vsub.f32 %v1277, %v1373
        %v1378 = vsub.f32 %v1280, %v1373
        %v1379 = vmul.f32 %v1377, %v1376
        %v1380 = vmul.f32 %v1378, %v1376
        %v1382 = vlaneseq
        %v1383 = vshrl.u32 %v1382, 7
        %v1384 = vsub.s32 0, %v1383
        %v1385 = vrot.slane %v1283, %v1384
        %v1387 = vmul.f32 %v1379, %v1385
        %v1388 = vmul.f32 %v1380, %v1385
        %v1390 = vlaneseq
        %v1391 = vshrl.u32 %v1390, 7
        %v1392 = vsub.s32 0, %v1391
        %v1393 = vrot.slane %v1284, %v1392
        %v1395 = vadd.f32 %v1387, %v1393
        %v1396 = vadd.f32 %v1388, %v1393
        %v1397 = vmul.f32 %v1395, 0.5
        %v1398 = vmul.f32 %v1396, 0.5
        %v1399 = vmul.f32 %v1395, %v792
        %v1400 = vmul.f32 %v1396, %v792
        %v1401 = verf.f32.pop %v1399
        %v1402 = verf.f32.pop %v1400
        %v1403 = vadd.f32 %v1401, 1.0
        %v1404 = vadd.f32 %v1402, 1.0
        %v1405 = vmul.f32 %v1397, %v1403
        %v1406 = vmul.f32 %v1398, %v1404
        %v1407 = vld [vmem:[#allocation13] sm:$0xf]
        %v1408 = vld [vmem:[#allocation13 + $0x4] sm:$0xf]
        %v1409 = vld [vmem:[#allocation13 + $0x8] sm:$0xf]
        %v1410 = vld [vmem:[#allocation13 + $0xc] sm:$0xf]
        %v1411 = vld [vmem:[#allocation13 + $0x10] sm:$0xf]
        %v1412 = vld [vmem:[#allocation13 + $0x14] sm:$0xf]
        %v1413 = vld [vmem:[#allocation13 + $0x18] sm:$0xf]
        %v1414 = vld [vmem:[#allocation13 + $0x1c] sm:$0xf]
        %v1415 = vld [vmem:[#allocation13 + $0x20] sm:$0xf]
        %v1416 = vld [vmem:[#allocation13 + $0x24] sm:$0xf]
        %v1417 = vld [vmem:[#allocation13 + $0x28] sm:$0xf]
        %v1418 = vld [vmem:[#allocation13 + $0x2c] sm:$0xf]
        %v1419 = vld [vmem:[#allocation13 + $0x30] sm:$0xf]
        %v1420 = vld [vmem:[#allocation13 + $0x34] sm:$0xf]
        %v1421 = vld [vmem:[#allocation13 + $0x38] sm:$0xf]
        %v1422 = vld [vmem:[#allocation13 + $0x3c] sm:$0xf]
        %v1423 = vld [vmem:[%s14] sm:$0x1]
        %v1424 = vpack.c.bf16 %v1406, %v1405
        %v1426 = vlaneseq
        %v1427 = vshrl.u32 %v1426, 7
        %v1428 = vsub.s32 0, %v1427
        %v1429 = vrot.slane %v1423, %v1428
        %v1447 = vunpack.c.l.b16 %v1407
        %v1448 = vunpack.c.l.b16 %v1408
        %v1449 = vunpack.c.l.b16 %v1409
        %v1450 = vunpack.c.l.b16 %v1410
        %v1451 = vunpack.c.l.b16 %v1411
        %v1452 = vunpack.c.l.b16 %v1412
        %v1453 = vunpack.c.l.b16 %v1413
        %v1454 = vunpack.c.l.b16 %v1414
        %v1455 = vunpack.c.l.b16 %v1415
        %v1456 = vunpack.c.l.b16 %v1416
        %v1457 = vunpack.c.l.b16 %v1417
        %v1458 = vunpack.c.l.b16 %v1418
        %v1459 = vunpack.c.l.b16 %v1419
        %v1460 = vunpack.c.l.b16 %v1420
        %v1461 = vunpack.c.l.b16 %v1421
        %v1462 = vunpack.c.l.b16 %v1422
        %v1463 = vpack.c.b16 %v1448, %v1447
        %v1464 = vpack.c.b16 %v1450, %v1449
        %v1465 = vpack.c.b16 %v1452, %v1451
        %v1466 = vpack.c.b16 %v1454, %v1453
        %v1467 = vpack.c.b16 %v1456, %v1455
        %v1468 = vpack.c.b16 %v1458, %v1457
        %v1469 = vpack.c.b16 %v1460, %v1459
        %v1470 = vpack.c.b16 %v1462, %v1461
        %1479 = vmatprep.subr.bf16.mxu0 0
        %1480 = vmatpush1.bf16.msra.mxu0 %v1470
        %1481 = vmatprep.subr.bf16.mxu0 0
        %1482 = vmatpush1.bf16.msra.mxu0 %v1469
        %1483 = vmatprep.subr.bf16.mxu0 0
        %1484 = vmatpush1.bf16.msra.mxu0 %v1468
        %1485 = vmatprep.subr.bf16.mxu0 0
        %1486 = vmatpush1.bf16.msra.mxu0 %v1467
        %1487 = vmatprep.subr.bf16.mxu0 0
        %1488 = vmatpush1.bf16.msra.mxu0 %v1466
        %1489 = vmatprep.subr.bf16.mxu0 0
        %1490 = vmatpush1.bf16.msra.mxu0 %v1465
        %1491 = vmatprep.subr.bf16.mxu0 0
        %1492 = vmatpush1.bf16.msra.mxu0 %v1464
        %1493 = vmatprep.subr.bf16.mxu0 0
        %1494 = vmatpush1.bf16.msra.mxu0 %v1463
        %1495 = vmatprep.subr.bf16.mxu0 0
        %1496 = vmatpush2.bf16.msra.mxu0 0
        %1497 = vmatprep.subr.bf16.mxu0 0
        %1498 = vmatpush2.bf16.msra.mxu0 0
        %1499 = vmatprep.subr.bf16.mxu0 0
        %1500 = vmatpush2.bf16.msra.mxu0 0
        %1501 = vmatprep.subr.bf16.mxu0 0
        %1502 = vmatpush2.bf16.msra.mxu0 0
        %1503 = vmatprep.subr.bf16.mxu0 0
        %1504 = vmatpush2.bf16.msra.mxu0 0
        %1505 = vmatprep.subr.bf16.mxu0 0
        %1506 = vmatpush2.bf16.msra.mxu0 0
        %1507 = vmatprep.subr.bf16.mxu0 0
        %1508 = vmatpush2.bf16.msra.mxu0 0
        %1509 = vmatprep.subr.bf16.mxu0 0
        %1510 = vmatpush2.bf16.msra.mxu0 0
        %1511 = vmatprep.mubr.bf16.mxu0 0
        %1512 = vmatmul.mubr.bf16.gmra.mxu0 %v1424
        %v1513 = vpop.f32.mrf.mxu0
        %v1514 = vadd.f32 %v1429, %v1513
        %v1515 = vpop.f32.mrf.mxu0
        %v1516 = vpop.f32.mrf.mxu0
        %v1517 = vadd.f32 %v1429, %v1516
        %v1518 = vpop.f32.mrf.mxu0
        %1519 = vdwg.mxu0
        %v1520 = vmul.f32 %v1514, 0.5
        %v1521 = vmul.f32 %v1517, 0.5
        %v1522 = vmul.f32 %v1514, %v792
        %v1523 = vmul.f32 %v1517, %v792
        %v1524 = verf.f32.pop %v1522
        %v1525 = verf.f32.pop %v1523
        %v1526 = vadd.f32 %v1524, 1.0
        %v1527 = vadd.f32 %v1525, 1.0
        %v1528 = vmul.f32 %v1520, %v1526
        %v1529 = vmul.f32 %v1521, %v1527
        %v1530 = vld [vmem:[#allocation14] sm:$0xf]
        %v1531 = vld [vmem:[#allocation14 + $0x4] sm:$0xf]
        %v1532 = vld [vmem:[#allocation14 + $0x8] sm:$0xf]
        %v1533 = vld [vmem:[#allocation14 + $0xc] sm:$0xf]
        %v1534 = vld [vmem:[#allocation14 + $0x10] sm:$0xf]
        %v1535 = vld [vmem:[#allocation14 + $0x14] sm:$0xf]
        %v1536 = vld [vmem:[#allocation14 + $0x18] sm:$0xf]
        %v1537 = vld [vmem:[#allocation14 + $0x1c] sm:$0xf]
        %v1538 = vld [vmem:[#allocation14 + $0x20] sm:$0xf]
        %v1539 = vld [vmem:[#allocation14 + $0x24] sm:$0xf]
        %v1540 = vld [vmem:[#allocation14 + $0x28] sm:$0xf]
        %v1541 = vld [vmem:[#allocation14 + $0x2c] sm:$0xf]
        %v1542 = vld [vmem:[#allocation14 + $0x30] sm:$0xf]
        %v1543 = vld [vmem:[#allocation14 + $0x34] sm:$0xf]
        %v1544 = vld [vmem:[#allocation14 + $0x38] sm:$0xf]
        %v1545 = vld [vmem:[#allocation14 + $0x3c] sm:$0xf]
        %v1546 = vld [vmem:[%s16] sm:$0x1]
        %v1547 = vpack.c.bf16 %v1529, %v1528
        %v1549 = vlaneseq
        %v1550 = vshrl.u32 %v1549, 7
        %v1551 = vsub.s32 0, %v1550
        %v1552 = vrot.slane %v1546, %v1551
        %v1570 = vunpack.c.l.b16 %v1530
        %v1571 = vunpack.c.l.b16 %v1531
        %v1572 = vunpack.c.l.b16 %v1532
        %v1573 = vunpack.c.l.b16 %v1533
        %v1574 = vunpack.c.l.b16 %v1534
        %v1575 = vunpack.c.l.b16 %v1535
        %v1576 = vunpack.c.l.b16 %v1536
        %v1577 = vunpack.c.l.b16 %v1537
        %v1578 = vunpack.c.l.b16 %v1538
        %v1579 = vunpack.c.l.b16 %v1539
        %v1580 = vunpack.c.l.b16 %v1540
        %v1581 = vunpack.c.l.b16 %v1541
        %v1582 = vunpack.c.l.b16 %v1542
        %v1583 = vunpack.c.l.b16 %v1543
        %v1584 = vunpack.c.l.b16 %v1544
        %v1585 = vunpack.c.l.b16 %v1545
        %v1586 = vpack.c.b16 %v1571, %v1570
        %v1587 = vpack.c.b16 %v1573, %v1572
        %v1588 = vpack.c.b16 %v1575, %v1574
        %v1589 = vpack.c.b16 %v1577, %v1576
        %v1590 = vpack.c.b16 %v1579, %v1578
        %v1591 = vpack.c.b16 %v1581, %v1580
        %v1592 = vpack.c.b16 %v1583, %v1582
        %v1593 = vpack.c.b16 %v1585, %v1584
        %1602 = vmatprep.subr.bf16.mxu0 0
        %1603 = vmatpush1.bf16.msra.mxu0 %v1593
        %1604 = vmatprep.subr.bf16.mxu0 0
        %1605 = vmatpush1.bf16.msra.mxu0 %v1592
        %1606 = vmatprep.subr.bf16.mxu0 0
        %1607 = vmatpush1.bf16.msra.mxu0 %v1591
        %1608 = vmatprep.subr.bf16.mxu0 0
        %1609 = vmatpush1.bf16.msra.mxu0 %v1590
        %1610 = vmatprep.subr.bf16.mxu0 0
        %1611 = vmatpush1.bf16.msra.mxu0 %v1589
        %1612 = vmatprep.subr.bf16.mxu0 0
        %1613 = vmatpush1.bf16.msra.mxu0 %v1588
        %1614 = vmatprep.subr.bf16.mxu0 0
        %1615 = vmatpush1.bf16.msra.mxu0 %v1587
        %1616 = vmatprep.subr.bf16.mxu0 0
        %1617 = vmatpush1.bf16.msra.mxu0 %v1586
        %1618 = vmatprep.subr.bf16.mxu0 0
        %1619 = vmatpush2.bf16.msra.mxu0 0
        %1620 = vmatprep.subr.bf16.mxu0 0
        %1621 = vmatpush2.bf16.msra.mxu0 0
        %1622 = vmatprep.subr.bf16.mxu0 0
        %1623 = vmatpush2.bf16.msra.mxu0 0
        %1624 = vmatprep.subr.bf16.mxu0 0
        %1625 = vmatpush2.bf16.msra.mxu0 0
        %1626 = vmatprep.subr.bf16.mxu0 0
        %1627 = vmatpush2.bf16.msra.mxu0 0
        %1628 = vmatprep.subr.bf16.mxu0 0
        %1629 = vmatpush2.bf16.msra.mxu0 0
        %1630 = vmatprep.subr.bf16.mxu0 0
        %1631 = vmatpush2.bf16.msra.mxu0 0
        %1632 = vmatprep.subr.bf16.mxu0 0
        %1633 = vmatpush2.bf16.msra.mxu0 0
        %1634 = vmatprep.mubr.bf16.mxu0 0
        %1635 = vmatmul.mubr.bf16.gmra.mxu0 %v1547
        %v1636 = vpop.f32.mrf.mxu0
        %v1637 = vadd.f32 %v1552, %v1636
        %v1638 = vpop.f32.mrf.mxu0
        %v1639 = vpop.f32.mrf.mxu0
        %v1640 = vadd.f32 %v1552, %v1639
        %v1641 = vpop.f32.mrf.mxu0
        %1642 = vdwg.mxu0
        %1643 = vst [vmem:[%s668] sm:$0xff] %v1637
        %1644 = vst [vmem:[%s668 + $0x8] sm:$0xff] %v1640
        %s1645 = sand.u32 %s408, 1
        %s1646 = scalar_lea.sflag [#allocation4], %s1645
        %s1647 = sand.u32 %s408, 1
        %s1648 = smul.addr %s1647, 16
        %s1649 = scalar_lea.vmem [#allocation16], %s1648
        // Predicated region
        $region121: #{tpu_custom_call.1} parent=87 // pred_check
          %p1650 = pneg %p418
        $region122: #{tpu_custom_call.1} parent=87 // pred_check_branch
          %1652 = sbr.rel (%p1650) target = $region124
        $region123: #{tpu_custom_call.1} parent=87 // pred_region
          %s1654 = ssub.s32 256, 256
          %1655 = vsyncadd %s1646, %s1654
          %s1656 = smul.addr %s38, 2
          %s1657 = smul.addr %s1656, 128
          %s1658 = scalar_lea.hbm %s17, %s1657
          %s1659 = sshll.u32 %s1649, 4
          %s1660 = int_to_ptr.vmem [resolvable:$true] %s1659
          %1665 = dma.vmem_to_hbm [thread:$0]  %s1660, 256, %s1658, %s1646, 128, 128, 8
        $region124: #{tpu_custom_call.1} parent=87 // pred_fallthru
          _
      $region88: #{tpu_custom_call.1} parent=5 // pred_fallthru
        _
      %p1666 = scmp.le.s32.totalorder 2, %s33
      // Predicated region
      $region125: #{tpu_custom_call.1} parent=5 // pred_check
        %p1667 = pneg %p1666
      $region126: #{tpu_custom_call.1} parent=5 // pred_check_branch
        %1669 = sbr.rel (%p1667) target = $region128
      $region127: #{tpu_custom_call.1} parent=5 // pred_region
        %s1670 = ssub.s32 %s33, 2
        // Predicated region
        $region129: #{tpu_custom_call.1} parent=127 // pred_check
          %p1671 = pneg %p424
        $region130: #{tpu_custom_call.1} parent=127 // pred_check_branch
          %1673 = sbr.rel (%p1671) target = $region132
        $region131: #{tpu_custom_call.1} parent=127 // pred_region
          %s1674 = sand.u32 %s409, 1
          %s1675 = scalar_lea.sflag [#allocation4], %s1674
          %s1676 = sand.u32 %s409, 1
          %s1677 = smul.addr %s1676, 16
          %s1678 = scalar_lea.vmem [#allocation16], %s1677
          %1679 = dma.done %s1675, 256
        $region132: #{tpu_custom_call.1} parent=127 // pred_fallthru
          _
      $region128: #{tpu_custom_call.1} parent=5 // pred_fallthru
        _
    $region6: #{tpu_custom_call.1} parent=1 // loop_footer
      %s37 = sadd.s32 1, %s33
    $region7: #{tpu_custom_call.1} parent=1 // loop_footer_branch
      %32 = sbr.rel target = $region3
    $region8: #{tpu_custom_call.1} parent=1 // loop_exit
      _
    %1680 = vsyncpa [#allocation3], 1
    %s1681 = scalar_lea.sflag [#allocation3], 1
    %1682 = vsyncpa %s1681, 1
    %1683 = vsyncpa [#allocation6], 1
    %1684 = vsyncpa [#allocation9], 1
    %1685 = vsyncpa [#allocation12], 1
    %1686 = vsyncpa [#allocation15], 1
    %1687 = vsyncpa [#allocation4], 1
    %s1688 = scalar_lea.sflag [#allocation4], 1
    %1689 = vsyncpa %s1688, 1

</llo_original>
